<compile_context>
chip_gen: v6e
topology: v6e:2x2x1
jax: 0.10.0
libtpu: 0.0.40
codegen_flags: <defaults>
</compile_context>

<pallas_src>
import jax
import jax.numpy as jnp
from jax import lax
from jax.experimental import pallas as pl
from jax.experimental.pallas import tpu as pltpu

# ---- scaled-down AMGCN dimensions ----
N = 2               # batch
C_IN = 3            # image channels
C_IN_PAD = 8        # padded contraction dim for the backbone matmul
H = 16
W = 16
HW = H * W
C = 64              # backbone feature channels (2048 in the paper)
RED = 16            # CBAM reduction
CR = C // RED       # 4
K = 15              # num_nodes == num_classes
GCN_OUT = 16        # GCN out_features (512 in the paper)
NUM_CLASSES = K
NC_PAD = 128        # lane-padded classifier width
KG = K * GCN_OUT    # 240
KG_PAD = 256        # padded (node, feature) flat width
LEAKY_SLOPE = 0.01

# row offsets inside the 16-lane weight pack
ROW_WBT = 0          # (C, C_IN_PAD)
ROW_W2 = C           # (C, CR)
ROW_WD = 2 * C       # (C, GCN_OUT)
P16_ROWS = 3 * C     # 192

# row offsets inside the 128-lane weight pack
ROW_W1 = 0           # (CR, C)   in rows 0:4
ROW_FCS = 8          # (GCN_OUT, NC_PAD)
ROW_FCB = 24         # (1, NC_PAD)
ROW_FCW = 32         # (KG_PAD, NC_PAD)
P128_ROWS = ROW_FCW + KG_PAD   # 288


def _leaky_relu(v):
    return jnp.where(v >= 0, v, LEAKY_SLOPE * v)


# --------------------------------------------------------------------------------------
# Fused kernel: backbone 1x1 conv -> CBAM (channel + spatial) -> GAP -> GraphConv -> FC
# All data fits in VMEM (< 1 MiB), so a single grid=() invocation is used.
# --------------------------------------------------------------------------------------
def _amgcn_kernel(x_ref, wp16_ref, wp128_ref, big_ref, out_ref, big_vmem, dma_sem):
    # Kick off the big (Toeplitz conv operator + static GCN weight) HBM -> VMEM copy now;
    # it overlaps with the backbone conv and the channel-attention stage below.
    big_cp = pltpu.make_async_copy(big_ref, big_vmem, dma_sem)
    big_cp.start()

    # static slices of the packed weight buffers (zero-cost views)
    wbt = wp16_ref[ROW_WBT:ROW_WBT + C, 0:C_IN_PAD]          # (C, 8)
    w2 = wp16_ref[ROW_W2:ROW_W2 + C, 0:CR]                   # (C, CR)
    wd = wp16_ref[ROW_WD:ROW_WD + C, 0:GCN_OUT]              # (C, GCN_OUT)
    w1 = wp128_ref[ROW_W1:ROW_W1 + CR, 0:C]                  # (CR, C)
    fcw_sum = wp128_ref[ROW_FCS:ROW_FCS + GCN_OUT, :]        # (GCN_OUT, NC_PAD)
    fcb = wp128_ref[ROW_FCB:ROW_FCB + 1, :]                  # (1, NC_PAD)
    fcw_flat = wp128_ref[ROW_FCW:ROW_FCW + KG_PAD, :]        # (KG_PAD, NC_PAD)

    # ---- backbone 1x1 conv, lane-dense: (C,8) @ (8, N*HW) -> (C, N*HW) = (64, 512) ----
    fmap_all = jnp.dot(wbt, x_ref[...], preferred_element_type=jnp.float32)
    f_n = [fmap_all[:, n * HW:(n + 1) * HW] for n in range(N)]        # per-batch (C, HW)

    # ---- CBAM channel attention: avg & max of BOTH batch elements through the MLP once ----
    stats = jnp.concatenate(
        [jnp.sum(f, axis=1, keepdims=True) * (1.0 / HW) for f in f_n]
        + [jnp.max(f, axis=1, keepdims=True) for f in f_n], axis=1)   # (C, 2N)
    hid = jnp.maximum(jnp.dot(w1, stats, preferred_element_type=jnp.float32), 0.0)  # (CR, 2N)
    mlp = jnp.dot(w2, hid, preferred_element_type=jnp.float32)                      # (C, 2N)
    att_c = jax.nn.sigmoid(mlp[:, 0:N] + mlp[:, N:2 * N])             # (C, N)

    # channel-attended features, still lane-dense (C, N*HW)
    xca_all = jnp.concatenate([f_n[n] * att_c[:, n:n + 1] for n in range(N)], axis=1)

    # ---- CBAM spatial attention: per-position channel mean/max, one Toeplitz matmul ----
    mean_c = jnp.sum(xca_all, axis=0, keepdims=True) * (1.0 / C)      # (1, N*HW)
    max_c = jnp.max(xca_all, axis=0, keepdims=True)                   # (1, N*HW)
    sp_all = jnp.concatenate(
        [jnp.concatenate([mean_c[:, n * HW:(n + 1) * HW],
                          max_c[:, n * HW:(n + 1) * HW]], axis=1)
         for n in range(N)], axis=0)                                  # (N, 2HW) = (2, 512)

    big_cp.wait()                                                     # convm / ws ready in VMEM
    convm = big_vmem[0:2 * HW, :]                                     # (2HW, HW) = (512, 256)
    ws_scaled = big_vmem[2 * HW:2 * HW + C, :]                        # (C, KG_PAD) = (64, 256)

    att_s = jax.nn.sigmoid(
        jnp.dot(sp_all, convm, preferred_element_type=jnp.float32))   # (N, HW) = (2, 256)

    # ---- adaptive avg pool of (xca * att_s), fused into one contraction per batch row ----
    feat = jnp.concatenate(
        [lax.dot_general(att_s[n:n + 1, :], xca_all[:, n * HW:(n + 1) * HW],
                         (((1,), (1,)), ((), ())),
                         preferred_element_type=jnp.float32)
         for n in range(N)], axis=0) * (1.0 / HW)                     # (N, C)

    # ---- GraphConv dynamic branch: softmax(feat @ feat^T) mixes the batch ----
    sim = lax.dot_general(feat, feat, (((1,), (1,)), ((), ())),
                          preferred_element_type=jnp.float32)         # (N, N)
    dyn = jax.nn.softmax(sim, axis=-1)
    dfeat = jnp.dot(dyn, feat, preferred_element_type=jnp.float32)    # (N, C)
    dact = _leaky_relu(jnp.dot(dfeat, wd, preferred_element_type=jnp.float32))  # (N, GCN_OUT)

    # ---- GraphConv static branch (adj row-sums folded into ws_scaled) + classifier ----
    p_flat = _leaky_relu(jnp.dot(feat, ws_scaled,
                                 preferred_element_type=jnp.float32))  # (N, KG_PAD)
    out = (jnp.dot(p_flat, fcw_flat, preferred_element_type=jnp.float32)
           + jnp.dot(dact, fcw_sum, preferred_element_type=jnp.float32)
           + fcb)                                                      # (N, NC_PAD)
    out_ref[...] = out


# --------------------------------------------------------------------------------------
# One-time weight preparation (hoisted out of the per-forward path).
# --------------------------------------------------------------------------------------
def _build_conv_matrix(conv_w_flat):
    """Toeplitz operator of the 7x7, pad=3 conv: (2*HW, HW) so out = [mean|max] @ M."""
    wk = conv_w_flat.reshape(2, 7, 7)
    ii = jnp.arange(H)
    jj = jnp.arange(W)
    d_i = ii[:, None] - ii[None, :] + 3        # [q_i, o_i]
    d_j = jj[:, None] - jj[None, :] + 3        # [q_j, o_j]
    valid = (((d_i >= 0) & (d_i < 7))[:, None, :, None]
             & ((d_j >= 0) & (d_j < 7))[None, :, None, :])
    m = wk[:, jnp.clip(d_i, 0, 6)[:, None, :, None],
           jnp.clip(d_j, 0, 6)[None, :, None, :]]        # (2, H, W, H, W): [c,qi,qj,oi,oj]
    m = m * valid.astype(jnp.float32)
    return m.reshape(2 * HW, HW)


def prepare_weights(p):
    """Pure weight reformatting, executed ONCE (not per forward)."""
    wbt = p['wb'].T                                                  # (C, C_IN_PAD)
    convm = _build_conv_matrix(p['cbam_conv_w'])                     # (2HW, HW)

    # Fold static_adj row-sums into a K-tiled copy of the static weight. Exact because the
    # per-node scale is linear and applied before the leaky_relu:
    #   leaky(rs[k] * (feat @ ws)) == leaky(feat @ (rs[k] * ws))
    rs = p['static_adj'].sum(axis=1)                                 # (K,)
    ws_scaled = jnp.tile(p['ws'], (1, K)) * jnp.repeat(rs, GCN_OUT)[None, :]   # (C, KG)
    ws_scaled = jnp.pad(ws_scaled, ((0, 0), (0, KG_PAD - KG)))                 # (C, KG_PAD)

    # classifier weights, padded to lane-dense (zero pad rows meet leaky(0)=0 activations)
    fcw_flat = p['fc_w_nodes'].reshape(KG, NUM_CLASSES)
    fcw_flat = jnp.pad(fcw_flat, ((0, KG_PAD - KG), (0, NC_PAD - NUM_CLASSES)))  # (KG_PAD,128)
    fcw_sum = jnp.pad(p['fc_w_nodes'].sum(axis=0),
                      ((0, 0), (0, NC_PAD - NUM_CLASSES)))                       # (G, 128)
    fcb = jnp.pad(p['fc_b'], ((0, 0), (0, NC_PAD - NUM_CLASSES)))                # (1, 128)

    def pad_cols(a, width):
        return jnp.pad(a, ((0, 0), (0, width - a.shape[1])))

    def pad_block(a, rows, width):
        return jnp.pad(a, ((0, rows - a.shape[0]), (0, width - a.shape[1])))

    # 16-lane pack: backbone weight, CBAM fc2, dynamic GCN weight
    wpack16 = jnp.concatenate(
        [pad_cols(wbt, 16), pad_cols(p['cbam_w2'], 16), pad_cols(p['wd'], 16)],
        axis=0)                                                      # (192, 16)

    # 128-lane pack: CBAM fc1, summed/flat classifier weights, bias
    wpack128 = jnp.concatenate(
        [pad_block(p['cbam_w1'], 8, NC_PAD),          # rows 0:8   (w1 in [0:4, 0:64])
         pad_block(fcw_sum, 16, NC_PAD),              # rows 8:24
         pad_block(fcb, 8, NC_PAD),                   # rows 24:32 (fcb in row 24)
         fcw_flat],                                   # rows 32:288
        axis=0)                                       # (288, 128)

    # big HBM-resident pack: Toeplitz conv operator on top, scaled static weight below.
    bigpack = jnp.concatenate([convm, ws_scaled], axis=0)            # (2HW + C, KG_PAD)

    return {'wpack16': wpack16, 'wpack128': wpack128, 'bigpack': bigpack}


# --------------------------------------------------------------------------------------
# Forward wrapper (per-call work: image layout + one pallas_call + logits slice)
# --------------------------------------------------------------------------------------
def amgcn_forward(x_img, prep):
    # lane-dense image layout: (C_IN_PAD, N*HW) = (8, 512)
    x_cf = jnp.transpose(x_img.reshape(N, C_IN, HW), (1, 0, 2)).reshape(C_IN, N * HW)
    x_cf = jnp.pad(x_cf, ((0, C_IN_PAD - C_IN), (0, 0)))

    vmem = pl.BlockSpec(memory_space=pltpu.MemorySpace.VMEM)
    out_pad = pl.pallas_call(
        _amgcn_kernel,
        out_shape=jax.ShapeDtypeStruct((N, NC_PAD), jnp.float32),
        in_specs=[vmem, vmem, vmem, pl.BlockSpec(memory_space=pl.ANY)],
        out_specs=vmem,
        scratch_shapes=[pltpu.VMEM((2 * HW + C, KG_PAD), jnp.float32),
                        pltpu.SemaphoreType.DMA],
    )(x_cf, prep['wpack16'], prep['wpack128'], prep['bigpack'])
    return out_pad[:, :NUM_CLASSES]


# --------------------------------------------------------------------------------------
# Pure-JAX reference of the same math (sanity check)
# --------------------------------------------------------------------------------------
def amgcn_reference(x_img, p):
    wb = p['wb'][:C_IN]
    fm = jnp.einsum('nchw,cd->ndhw', x_img, wb)
    avg = fm.mean(axis=(2, 3))
    mx = fm.max(axis=(2, 3))

    def mlp(v):
        return jnp.maximum(v @ p['cbam_w1'].T, 0.0) @ p['cbam_w2'].T

    att = jax.nn.sigmoid(mlp(avg) + mlp(mx))
    xca = fm * att[:, :, None, None]
    sp = jnp.stack([xca.mean(axis=1), xca.max(axis=1)], axis=1)
    convw = p['cbam_conv_w'].reshape(1, 2, 7, 7)
    satt = jax.nn.sigmoid(lax.conv_general_dilated(
        sp, convw, (1, 1), ((3, 3), (3, 3)),
        dimension_numbers=('NCHW', 'OIHW', 'NCHW')))
    xsa = xca * satt
    feat = xsa.mean(axis=(2, 3))
    rs = p['static_adj'].sum(axis=1)
    fw = feat @ p['ws']
    static_out = _leaky_relu(rs[None, :, None] * fw[:, None, :])
    dyn = jax.nn.softmax(feat @ feat.T, axis=-1)
    dw = (dyn @ feat) @ p['wd']
    g = static_out + _leaky_relu(dw)[:, None, :]
    fcw = p['fc_w_nodes'].reshape(K * GCN_OUT, NUM_CLASSES)
    return g.reshape(N, -1) @ fcw + p['fc_b']


def init_params(key):
    ks = jax.random.split(key, 8)
    p = {}
    p['wb'] = jnp.pad(jax.random.normal(ks[0], (C_IN, C), jnp.float32) * 1.0,
                      ((0, C_IN_PAD - C_IN), (0, 0)))
    p['cbam_w1'] = jax.random.normal(ks[1], (CR, C), jnp.float32) * (1.0 / C) ** 0.5
    p['cbam_w2'] = jax.random.normal(ks[2], (C, CR), jnp.float32) * (1.0 / CR) ** 0.5
    p['cbam_conv_w'] = (jax.random.normal(ks[3], (2, 7, 7), jnp.float32) * 0.3).reshape(-1)
    p['static_adj'] = jnp.ones((K, K), jnp.float32) * 0.1              # as in GraphConv.__init__
    p['ws'] = jax.random.normal(ks[4], (C, GCN_OUT), jnp.float32) * (3.0 / C) ** 0.5
    p['wd'] = jax.random.normal(ks[5], (C, GCN_OUT), jnp.float32) * (3.0 / C) ** 0.5
    fc_w = jax.random.normal(ks[6], (K * GCN_OUT, NUM_CLASSES), jnp.float32) \
        * (3.0 / (K * GCN_OUT)) ** 0.5
    p['fc_w_nodes'] = fc_w.reshape(K, GCN_OUT, NUM_CLASSES)
    p['fc_b'] = jax.random.normal(ks[7], (1, NUM_CLASSES), jnp.float32) * 0.1
    return p


if __name__ == "__main__":
    key = jax.random.PRNGKey(0)
    pkey, xkey = jax.random.split(key)
    params = init_params(pkey)
    prep = prepare_weights(params)            # one-time weight transforms (not per forward)
    x = jax.random.normal(xkey, (N, C_IN, H, W), jnp.float32)

    fwd = jax.jit(amgcn_forward)
    out = jax.block_until_ready(fwd(x, prep))

    assert out.shape == (N, NUM_CLASSES)
    assert bool(jnp.all(jnp.isfinite(out)))

    ref = amgcn_reference(x, params)
    max_err = float(jnp.max(jnp.abs(out - ref)))
    assert max_err < 5e-2, f"mismatch vs reference: {max_err}"

    print("KERNEL_OK")
</pallas_src>

<mosaic_0001>
module attributes {stable_mosaic.version = 11 : i64} {
  func.func @_amgcn_kernel(%arg0: memref<8x512xf32, #tpu.memory_space<vmem>>, %arg1: memref<192x16xf32, #tpu.memory_space<vmem>>, %arg2: memref<288x128xf32, #tpu.memory_space<vmem>>, %arg3: memref<576x256xf32, #tpu.memory_space<any>>, %arg4: memref<2x128xf32, #tpu.memory_space<vmem>>, %arg5: memref<576x256xf32, #tpu.memory_space<vmem>>, %arg6: memref<!tpu.dma_semaphore, #tpu.memory_space<semaphore_mem>>) attributes {dimension_semantics = [], scalar_prefetch = 0 : i64, scratch_operands = 2 : i64, tpu.core_type = #tpu.core_type<tc>} {
    tpu.enqueue_dma source(%arg3 : memref<576x256xf32, #tpu.memory_space<any>>) target(%arg5 : memref<576x256xf32, #tpu.memory_space<vmem>>) target_semaphore(%arg6 : memref<!tpu.dma_semaphore, #tpu.memory_space<semaphore_mem>>)
    %c0 = arith.constant 0 : index
    %c0_0 = arith.constant 0 : index
    %0 = vector.load %arg1[%c0, %c0_0] : memref<192x16xf32, #tpu.memory_space<vmem>>, vector<64x8xf32>
    %c64 = arith.constant 64 : index
    %c0_1 = arith.constant 0 : index
    %1 = vector.load %arg1[%c64, %c0_1] : memref<192x16xf32, #tpu.memory_space<vmem>>, vector<64x4xf32>
    %c128 = arith.constant 128 : index
    %c0_2 = arith.constant 0 : index
    %2 = vector.load %arg1[%c128, %c0_2] : memref<192x16xf32, #tpu.memory_space<vmem>>, vector<64x16xf32>
    %c0_3 = arith.constant 0 : index
    %c0_4 = arith.constant 0 : index
    %3 = vector.load %arg2[%c0_3, %c0_4] : memref<288x128xf32, #tpu.memory_space<vmem>>, vector<4x64xf32>
    %c8 = arith.constant 8 : index
    %c0_5 = arith.constant 0 : index
    %4 = vector.load %arg2[%c8, %c0_5] : memref<288x128xf32, #tpu.memory_space<vmem>>, vector<16x128xf32>
    %c24 = arith.constant 24 : index
    %c0_6 = arith.constant 0 : index
    %5 = vector.load %arg2[%c24, %c0_6] : memref<288x128xf32, #tpu.memory_space<vmem>>, vector<1x128xf32>
    %c32 = arith.constant 32 : index
    %c0_7 = arith.constant 0 : index
    %6 = vector.load %arg2[%c32, %c0_7] : memref<288x128xf32, #tpu.memory_space<vmem>>, vector<256x128xf32>
    %c0_8 = arith.constant 0 : index
    %c0_9 = arith.constant 0 : index
    %7 = vector.load %arg0[%c0_8, %c0_9] : memref<8x512xf32, #tpu.memory_space<vmem>>, vector<8x512xf32>
    %cst = arith.constant dense<0.000000e+00> : vector<64x512xf32>
    %8 = tpu.matmul %0, %7, %cst {dimension_numbers = #tpu.dot_dimension_numbers<[1], [0], [0], [1], [0, 0, 1, 1], [], []>} : vector<64x8xf32>, vector<8x512xf32>, vector<64x512xf32> -> vector<64x512xf32>
    %9 = vector.extract_strided_slice %8 {offsets = [0, 0], sizes = [64, 256], strides = [1, 1]} : vector<64x512xf32> to vector<64x256xf32>
    %10 = vector.extract_strided_slice %8 {offsets = [0, 256], sizes = [64, 256], strides = [1, 1]} : vector<64x512xf32> to vector<64x256xf32>
    %cst_10 = arith.constant dense<0.000000e+00> : vector<64xf32>
    %11 = vector.multi_reduction <add>, %9, %cst_10 [1] : vector<64x256xf32> to vector<64xf32>
    %12 = vector.shape_cast %11 : vector<64xf32> to vector<64x1xf32>
    %cst_11 = arith.constant 3.906250e-03 : f32
    %13 = vector.broadcast %cst_11 : f32 to vector<64x1xf32>
    %14 = arith.mulf %12, %13 : vector<64x1xf32>
    %cst_12 = arith.constant dense<0.000000e+00> : vector<64xf32>
    %15 = vector.multi_reduction <add>, %10, %cst_12 [1] : vector<64x256xf32> to vector<64xf32>
    %16 = vector.shape_cast %15 : vector<64xf32> to vector<64x1xf32>
    %cst_13 = arith.constant 3.906250e-03 : f32
    %17 = vector.broadcast %cst_13 : f32 to vector<64x1xf32>
    %18 = arith.mulf %16, %17 : vector<64x1xf32>
    %cst_14 = arith.constant dense<0xFF800000> : vector<64xf32>
    %19 = vector.multi_reduction <maximumf>, %9, %cst_14 [1] : vector<64x256xf32> to vector<64xf32>
    %20 = vector.shape_cast %19 : vector<64xf32> to vector<64x1xf32>
    %cst_15 = arith.constant dense<0xFF800000> : vector<64xf32>
    %21 = vector.multi_reduction <maximumf>, %10, %cst_15 [1] : vector<64x256xf32> to vector<64xf32>
    %22 = vector.shape_cast %21 : vector<64xf32> to vector<64x1xf32>
    %23 = tpu.concatenate %14, %18, %20, %22 in 1 : vector<64x1xf32>, vector<64x1xf32>, vector<64x1xf32>, vector<64x1xf32> -> vector<64x4xf32>
    %cst_16 = arith.constant dense<0.000000e+00> : vector<4x4xf32>
    %24 = tpu.matmul %3, %23, %cst_16 {dimension_numbers = #tpu.dot_dimension_numbers<[1], [0], [0], [1], [0, 0, 1, 1], [], []>} : vector<4x64xf32>, vector<64x4xf32>, vector<4x4xf32> -> vector<4x4xf32>
    %cst_17 = arith.constant 0.000000e+00 : f32
    %25 = vector.broadcast %cst_17 : f32 to vector<4x4xf32>
    %26 = arith.maximumf %24, %25 : vector<4x4xf32>
    %cst_18 = arith.constant dense<0.000000e+00> : vector<64x4xf32>
    %27 = tpu.matmul %1, %26, %cst_18 {dimension_numbers = #tpu.dot_dimension_numbers<[1], [0], [0], [1], [0, 0, 1, 1], [], []>} : vector<64x4xf32>, vector<4x4xf32>, vector<64x4xf32> -> vector<64x4xf32>
    %28 = vector.extract_strided_slice %27 {offsets = [0, 0], sizes = [64, 2], strides = [1, 1]} : vector<64x4xf32> to vector<64x2xf32>
    %29 = vector.extract_strided_slice %27 {offsets = [0, 2], sizes = [64, 2], strides = [1, 1]} : vector<64x4xf32> to vector<64x2xf32>
    %30 = arith.addf %28, %29 : vector<64x2xf32>
    %31 = arith.negf %30 : vector<64x2xf32>
    %32 = math.exp %31 : vector<64x2xf32>
    %cst_19 = arith.constant 1.000000e+00 : f32
    %33 = vector.broadcast %cst_19 : f32 to vector<64x2xf32>
    %34 = arith.addf %33, %32 : vector<64x2xf32>
    %35 = arith.divf %33, %34 : vector<64x2xf32>
    %36 = vector.extract_strided_slice %35 {offsets = [0, 0], sizes = [64, 1], strides = [1, 1]} : vector<64x2xf32> to vector<64x1xf32>
    %37 = vector.broadcast %36 : vector<64x1xf32> to vector<64x256xf32>
    %38 = arith.mulf %9, %37 : vector<64x256xf32>
    %39 = vector.extract_strided_slice %35 {offsets = [0, 1], sizes = [64, 1], strides = [1, 1]} : vector<64x2xf32> to vector<64x1xf32>
    %40 = vector.broadcast %39 : vector<64x1xf32> to vector<64x256xf32>
    %41 = arith.mulf %10, %40 : vector<64x256xf32>
    %42 = tpu.concatenate %38, %41 in 1 : vector<64x256xf32>, vector<64x256xf32> -> vector<64x512xf32>
    %cst_20 = arith.constant dense<0.000000e+00> : vector<512xf32>
    %43 = vector.multi_reduction <add>, %42, %cst_20 [0] : vector<64x512xf32> to vector<512xf32>
    %44 = vector.shape_cast %43 : vector<512xf32> to vector<1x512xf32>
    %cst_21 = arith.constant 1.562500e-02 : f32
    %45 = vector.broadcast %cst_21 : f32 to vector<1x512xf32>
    %46 = arith.mulf %44, %45 : vector<1x512xf32>
    %cst_22 = arith.constant dense<0xFF800000> : vector<512xf32>
    %47 = vector.multi_reduction <maximumf>, %42, %cst_22 [0] : vector<64x512xf32> to vector<512xf32>
    %48 = vector.shape_cast %47 : vector<512xf32> to vector<1x512xf32>
    %49 = vector.extract_strided_slice %46 {offsets = [0, 0], sizes = [1, 256], strides = [1, 1]} : vector<1x512xf32> to vector<1x256xf32>
    %50 = vector.extract_strided_slice %48 {offsets = [0, 0], sizes = [1, 256], strides = [1, 1]} : vector<1x512xf32> to vector<1x256xf32>
    %51 = tpu.concatenate %49, %50 in 1 : vector<1x256xf32>, vector<1x256xf32> -> vector<1x512xf32>
    %52 = vector.extract_strided_slice %46 {offsets = [0, 256], sizes = [1, 256], strides = [1, 1]} : vector<1x512xf32> to vector<1x256xf32>
    %53 = vector.extract_strided_slice %48 {offsets = [0, 256], sizes = [1, 256], strides = [1, 1]} : vector<1x512xf32> to vector<1x256xf32>
    %54 = tpu.concatenate %52, %53 in 1 : vector<1x256xf32>, vector<1x256xf32> -> vector<1x512xf32>
    %55 = tpu.concatenate %51, %54 in 0 : vector<1x512xf32>, vector<1x512xf32> -> vector<2x512xf32>
    tpu.wait_dma2 semaphore(%arg6 : memref<!tpu.dma_semaphore, #tpu.memory_space<semaphore_mem>>) src(%arg3 : memref<576x256xf32, #tpu.memory_space<any>>) dst(%arg5 : memref<576x256xf32, #tpu.memory_space<vmem>>)
    %c0_23 = arith.constant 0 : index
    %c0_24 = arith.constant 0 : index
    %56 = vector.load %arg5[%c0_23, %c0_24] : memref<576x256xf32, #tpu.memory_space<vmem>>, vector<512x256xf32>
    %c512 = arith.constant 512 : index
    %c0_25 = arith.constant 0 : index
    %57 = vector.load %arg5[%c512, %c0_25] : memref<576x256xf32, #tpu.memory_space<vmem>>, vector<64x256xf32>
    %cst_26 = arith.constant dense<0.000000e+00> : vector<2x256xf32>
    %58 = tpu.matmul %55, %56, %cst_26 {dimension_numbers = #tpu.dot_dimension_numbers<[1], [0], [0], [1], [0, 0, 1, 1], [], []>} : vector<2x512xf32>, vector<512x256xf32>, vector<2x256xf32> -> vector<2x256xf32>
    %59 = arith.negf %58 : vector<2x256xf32>
    %60 = math.exp %59 : vector<2x256xf32>
    %cst_27 = arith.constant 1.000000e+00 : f32
    %61 = vector.broadcast %cst_27 : f32 to vector<2x256xf32>
    %62 = arith.addf %61, %60 : vector<2x256xf32>
    %63 = arith.divf %61, %62 : vector<2x256xf32>
    %64 = vector.extract_strided_slice %63 {offsets = [0, 0], sizes = [1, 256], strides = [1, 1]} : vector<2x256xf32> to vector<1x256xf32>
    %65 = vector.extract_strided_slice %42 {offsets = [0, 0], sizes = [64, 256], strides = [1, 1]} : vector<64x512xf32> to vector<64x256xf32>
    %cst_28 = arith.constant dense<0.000000e+00> : vector<1x64xf32>
    %66 = tpu.matmul %64, %65, %cst_28 {dimension_numbers = #tpu.dot_dimension_numbers<[1], [1], [0], [0], [0, 0, 1, 0], [], []>} : vector<1x256xf32>, vector<64x256xf32>, vector<1x64xf32> -> vector<1x64xf32>
    %67 = vector.extract_strided_slice %63 {offsets = [1, 0], sizes = [1, 256], strides = [1, 1]} : vector<2x256xf32> to vector<1x256xf32>
    %68 = vector.extract_strided_slice %42 {offsets = [0, 256], sizes = [64, 256], strides = [1, 1]} : vector<64x512xf32> to vector<64x256xf32>
    %cst_29 = arith.constant dense<0.000000e+00> : vector<1x64xf32>
    %69 = tpu.matmul %67, %68, %cst_29 {dimension_numbers = #tpu.dot_dimension_numbers<[1], [1], [0], [0], [0, 0, 1, 0], [], []>} : vector<1x256xf32>, vector<64x256xf32>, vector<1x64xf32> -> vector<1x64xf32>
    %70 = tpu.concatenate %66, %69 in 0 : vector<1x64xf32>, vector<1x64xf32> -> vector<2x64xf32>
    %cst_30 = arith.constant 3.906250e-03 : f32
    %71 = vector.broadcast %cst_30 : f32 to vector<2x64xf32>
    %72 = arith.mulf %70, %71 : vector<2x64xf32>
    %cst_31 = arith.constant dense<0.000000e+00> : vector<2x2xf32>
    %73 = tpu.matmul %72, %72, %cst_31 {dimension_numbers = #tpu.dot_dimension_numbers<[1], [1], [0], [0], [0, 0, 1, 0], [], []>} : vector<2x64xf32>, vector<2x64xf32>, vector<2x2xf32> -> vector<2x2xf32>
    %cst_32 = arith.constant dense<0xFF800000> : vector<2xf32>
    %74 = vector.multi_reduction <maximumf>, %73, %cst_32 [1] : vector<2x2xf32> to vector<2xf32>
    %cst_33 = arith.constant 0xFF800000 : f32
    %75 = vector.broadcast %cst_33 : f32 to vector<2xf32>
    %76 = arith.maximumf %75, %74 : vector<2xf32>
    %77 = vector.shape_cast %76 : vector<2xf32> to vector<2x1xf32>
    %78 = vector.broadcast %77 : vector<2x1xf32> to vector<2x2xf32>
    %79 = arith.subf %73, %78 : vector<2x2xf32>
    %80 = math.exp %79 : vector<2x2xf32>
    %cst_34 = arith.constant dense<0.000000e+00> : vector<2xf32>
    %81 = vector.multi_reduction <add>, %80, %cst_34 [1] : vector<2x2xf32> to vector<2xf32>
    %82 = vector.shape_cast %81 : vector<2xf32> to vector<2x1xf32>
    %83 = vector.broadcast %82 : vector<2x1xf32> to vector<2x2xf32>
    %84 = arith.divf %80, %83 : vector<2x2xf32>
    %cst_35 = arith.constant dense<0.000000e+00> : vector<2x64xf32>
    %85 = tpu.matmul %84, %72, %cst_35 {dimension_numbers = #tpu.dot_dimension_numbers<[1], [0], [0], [1], [0, 0, 1, 1], [], []>} : vector<2x2xf32>, vector<2x64xf32>, vector<2x64xf32> -> vector<2x64xf32>
    %cst_36 = arith.constant dense<0.000000e+00> : vector<2x16xf32>
    %86 = tpu.matmul %85, %2, %cst_36 {dimension_numbers = #tpu.dot_dimension_numbers<[1], [0], [0], [1], [0, 0, 1, 1], [], []>} : vector<2x64xf32>, vector<64x16xf32>, vector<2x16xf32> -> vector<2x16xf32>
    %cst_37 = arith.constant 0.000000e+00 : f32
    %87 = vector.broadcast %cst_37 : f32 to vector<2x16xf32>
    %88 = arith.cmpf oge, %86, %87 : vector<2x16xf32>
    %cst_38 = arith.constant 0.00999999977 : f32
    %89 = vector.broadcast %cst_38 : f32 to vector<2x16xf32>
    %90 = arith.mulf %89, %86 : vector<2x16xf32>
    %91 = arith.select %88, %86, %90 : vector<2x16xi1>, vector<2x16xf32>
    %cst_39 = arith.constant dense<0.000000e+00> : vector<2x256xf32>
    %92 = tpu.matmul %72, %57, %cst_39 {dimension_numbers = #tpu.dot_dimension_numbers<[1], [0], [0], [1], [0, 0, 1, 1], [], []>} : vector<2x64xf32>, vector<64x256xf32>, vector<2x256xf32> -> vector<2x256xf32>
    %cst_40 = arith.constant 0.000000e+00 : f32
    %93 = vector.broadcast %cst_40 : f32 to vector<2x256xf32>
    %94 = arith.cmpf oge, %92, %93 : vector<2x256xf32>
    %cst_41 = arith.constant 0.00999999977 : f32
    %95 = vector.broadcast %cst_41 : f32 to vector<2x256xf32>
    %96 = arith.mulf %95, %92 : vector<2x256xf32>
    %97 = arith.select %94, %92, %96 : vector<2x256xi1>, vector<2x256xf32>
    %cst_42 = arith.constant dense<0.000000e+00> : vector<2x128xf32>
    %98 = tpu.matmul %97, %6, %cst_42 {dimension_numbers = #tpu.dot_dimension_numbers<[1], [0], [0], [1], [0, 0, 1, 1], [], []>} : vector<2x256xf32>, vector<256x128xf32>, vector<2x128xf32> -> vector<2x128xf32>
    %cst_43 = arith.constant dense<0.000000e+00> : vector<2x128xf32>
    %99 = tpu.matmul %91, %4, %cst_43 {dimension_numbers = #tpu.dot_dimension_numbers<[1], [0], [0], [1], [0, 0, 1, 1], [], []>} : vector<2x16xf32>, vector<16x128xf32>, vector<2x128xf32> -> vector<2x128xf32>
    %100 = arith.addf %98, %99 : vector<2x128xf32>
    %101 = vector.broadcast %5 : vector<1x128xf32> to vector<2x128xf32>
    %102 = arith.addf %100, %101 : vector<2x128xf32>
    %c0_44 = arith.constant 0 : index
    %c0_45 = arith.constant 0 : index
    %103 = vector.load %arg4[%c0_44, %c0_45] : memref<2x128xf32, #tpu.memory_space<vmem>>, vector<2x128xf32>
    tpu.vector_store %arg4[%c0_44, %c0_45], %102 {strides = array<i32>} : memref<2x128xf32, #tpu.memory_space<vmem>>, vector<2x128xf32>,
    return
  }
}

</mosaic_0001>

<llo_original>
// kernel: amgcn_forward.1
$region0: #{amgcn_forward.1}
  #allocation0 [shape = 'u32[]', space=smem, size = 0x4, offset = 0x4, fixed_abs, tag = 'smem constant byte address 0x4 - core index']
  #allocation1 [shape = 'u32[144,128]{1,0:T(1,128)}', space=vmem, size = 0x12000, scoped, tag = 'internal scratch']
  #allocation2 [shape = 'f32[576,256]{1,0:T(8,128)}', space=vmem, size = 0x90000, scoped, tag = 'scratch operand']
  #allocation3 [shape = 's32[1]{0}', space=sflag, size = 0x4, scoped, tag = 'scratch operand']
  #allocation6 [shape = 's32[]', space=sflag, size = 0x4, offset = 0, fixed_abs, tag = 'sflag constant byte address 0x0 - dummy sync flag']
  #allocation7 [shape = 's32[]', space=sflag, size = 0x4, offset = 0, fixed_abs, tag = 'sflag constant byte address 0x0 - dummy sync flag']
  #allocation8 [shape = 'u32[]', space=smem, size = 0x4, offset = 0x44, fixed_abs, tag = 'smem constant byte address 0x44 - assertion arg 0']
  #allocation9 [shape = 'u32[]', space=smem, size = 0x4, offset = 0x48, fixed_abs, tag = 'smem constant byte address 0x48 - assertion arg 1']
  %s0 = inlined_call_operand.vmem [shape: f32[8,512], index: 0, kind: input, shape index: {}]
  %s1 = inlined_call_operand.vmem [shape: f32[192,16], index: 1, kind: input, shape index: {}]
  %s2 = inlined_call_operand.vmem [shape: f32[288,128], index: 2, kind: input, shape index: {}]
  %s3 = inlined_call_operand.hbm [shape: f32[576,256], index: 3, kind: input, shape index: {}]
  %s4 = inlined_call_operand.hbm [shape: f32[2,128], index: 4, kind: output, shape index: {}]
  %s5 = sld [smem:[#allocation0]]
  $region26: #{amgcn_forward.1} parent=0
    _
  %s7 = ssub.s32 1, %s5
  %s8 = scalar_select 0, %s7, %s5
  $region1: #{amgcn_forward.1} parent=0
    #allocation4 [shape = 'u8[1024]{0}', space=vmem, size = 0x400, scoped, tag = 'output window, operand 0, single buffered']
    #allocation5 [shape = 's32[1]{0}', space=sflag, size = 0x4, scoped, tag = 'scoped memory for amgcn_forward.1']
    %9 = vsyncpa [#allocation5], 0
    // Predicated region
    $region2: #{amgcn_forward.1} parent=1 // pred_check
      _
    $region3: #{amgcn_forward.1} parent=1 // pred_check_branch
      %11 = sbr.rel (0) target = $region5
    $region4: #{amgcn_forward.1} parent=1 // pred_region
      _
    $region5: #{amgcn_forward.1} parent=1 // pred_fallthru
      _
    // Predicated region
    $region6: #{amgcn_forward.1} parent=1 // pred_check
      _
    $region7: #{amgcn_forward.1} parent=1 // pred_check_branch
      %13 = sbr.rel (0) target = $region9
    $region8: #{amgcn_forward.1} parent=1 // pred_region
      _
    $region9: #{amgcn_forward.1} parent=1 // pred_fallthru
      _
    // Predicated region
    $region10: #{amgcn_forward.1} parent=1 // pred_check
      _
    $region11: #{amgcn_forward.1} parent=1 // pred_check_branch
      %15 = sbr.rel (0) target = $region13
    $region12: #{amgcn_forward.1} parent=1 // pred_region
      _
    $region13: #{amgcn_forward.1} parent=1 // pred_fallthru
      _
    // Predicated region
    $region14: #{amgcn_forward.1} parent=1 // pred_check
      _
    $region15: #{amgcn_forward.1} parent=1 // pred_check_branch
      %17 = sbr.rel target = $region17
    $region16: #{amgcn_forward.1} parent=1 // pred_region
      %18 = sst [smem:[#allocation8]] [#allocation7]
      %19 = sst [smem:[#allocation9]] [#allocation6]
    $region17: #{amgcn_forward.1} parent=1 // pred_fallthru
      _
    %21 = shalt.err (0)
    %s23 = sshll.u32 [#allocation2], 4
    %s24 = int_to_ptr.vmem [resolvable:$true] %s23
    %26 = dma.hbm_to_vmem [thread:$0]  %s3, 18432, %s24, [#allocation3]
    %v27 = vld [vmem:[%s1] sm:$0xff]
    %v28 = vld [vmem:[%s1 + $0x8] sm:$0xff]
    %v29 = vld [vmem:[%s1 + $0x10] sm:$0xff]
    %v30 = vld [vmem:[%s1 + $0x18] sm:$0xff]
    %v31 = vld [vmem:[%s1 + $0x20] sm:$0xff]
    %v32 = vld [vmem:[%s1 + $0x28] sm:$0xff]
    %v33 = vld [vmem:[%s1 + $0x30] sm:$0xff]
    %v34 = vld [vmem:[%s1 + $0x38] sm:$0xff]
    %v35 = vld [vmem:[%s1 + $0x40] sm:$0xff]
    %v36 = vld [vmem:[%s1 + $0x48] sm:$0xff]
    %v37 = vld [vmem:[%s1 + $0x50] sm:$0xff]
    %v38 = vld [vmem:[%s1 + $0x58] sm:$0xff]
    %v39 = vld [vmem:[%s1 + $0x60] sm:$0xff]
    %v40 = vld [vmem:[%s1 + $0x68] sm:$0xff]
    %v41 = vld [vmem:[%s1 + $0x70] sm:$0xff]
    %v42 = vld [vmem:[%s1 + $0x78] sm:$0xff]
    %v43 = vld [vmem:[%s1 + $0x80] sm:$0xff]
    %v44 = vld [vmem:[%s1 + $0x88] sm:$0xff]
    %v45 = vld [vmem:[%s1 + $0x90] sm:$0xff]
    %v46 = vld [vmem:[%s1 + $0x98] sm:$0xff]
    %v47 = vld [vmem:[%s1 + $0xa0] sm:$0xff]
    %v48 = vld [vmem:[%s1 + $0xa8] sm:$0xff]
    %v49 = vld [vmem:[%s1 + $0xb0] sm:$0xff]
    %v50 = vld [vmem:[%s1 + $0xb8] sm:$0xff]
    %v51 = vld [vmem:[%s2] sm:$0xf]
    %v52 = vld [vmem:[%s2 + $0x8] sm:$0xff]
    %v53 = vld [vmem:[%s2 + $0x10] sm:$0xff]
    %v54 = vld [vmem:[%s2 + $0x18] sm:$0x1]
    %v55 = vld [vmem:[%s2 + $0x20] sm:$0xff]
    %v56 = vld [vmem:[%s2 + $0x28] sm:$0xff]
    %v57 = vld [vmem:[%s2 + $0x30] sm:$0xff]
    %v58 = vld [vmem:[%s2 + $0x38] sm:$0xff]
    %v59 = vld [vmem:[%s2 + $0x40] sm:$0xff]
    %v60 = vld [vmem:[%s2 + $0x48] sm:$0xff]
    %v61 = vld [vmem:[%s2 + $0x50] sm:$0xff]
    %v62 = vld [vmem:[%s2 + $0x58] sm:$0xff]
    %v63 = vld [vmem:[%s2 + $0x60] sm:$0xff]
    %v64 = vld [vmem:[%s2 + $0x68] sm:$0xff]
    %v65 = vld [vmem:[%s2 + $0x70] sm:$0xff]
    %v66 = vld [vmem:[%s2 + $0x78] sm:$0xff]
    %v67 = vld [vmem:[%s2 + $0x80] sm:$0xff]
    %v68 = vld [vmem:[%s2 + $0x88] sm:$0xff]
    %v69 = vld [vmem:[%s2 + $0x90] sm:$0xff]
    %v70 = vld [vmem:[%s2 + $0x98] sm:$0xff]
    %v71 = vld [vmem:[%s2 + $0xa0] sm:$0xff]
    %v72 = vld [vmem:[%s2 + $0xa8] sm:$0xff]
    %v73 = vld [vmem:[%s2 + $0xb0] sm:$0xff]
    %v74 = vld [vmem:[%s2 + $0xb8] sm:$0xff]
    %v75 = vld [vmem:[%s2 + $0xc0] sm:$0xff]
    %v76 = vld [vmem:[%s2 + $0xc8] sm:$0xff]
    %v77 = vld [vmem:[%s2 + $0xd0] sm:$0xff]
    %v78 = vld [vmem:[%s2 + $0xd8] sm:$0xff]
    %v79 = vld [vmem:[%s2 + $0xe0] sm:$0xff]
    %v80 = vld [vmem:[%s2 + $0xe8] sm:$0xff]
    %v81 = vld [vmem:[%s2 + $0xf0] sm:$0xff]
    %v82 = vld [vmem:[%s2 + $0xf8] sm:$0xff]
    %v83 = vld [vmem:[%s2 + $0x100] sm:$0xff]
    %v84 = vld [vmem:[%s2 + $0x108] sm:$0xff]
    %v85 = vld [vmem:[%s2 + $0x110] sm:$0xff]
    %v86 = vld [vmem:[%s2 + $0x118] sm:$0xff]
    %v87 = vld [vmem:[%s0] sm:$0xff]
    %v88 = vld [vmem:[%s0 + $0x8] sm:$0xff]
    %v89 = vld [vmem:[%s0 + $0x10] sm:$0xff]
    %v90 = vld [vmem:[%s0 + $0x18] sm:$0xff]
    %vm91 = vcmask 64512
    %v93 = vsel %vm91, %v27, 0
    %v96 = vsel %vm91, %v28, 0
    %v99 = vsel %vm91, %v29, 0
    %v102 = vsel %vm91, %v30, 0
    %v105 = vsel %vm91, %v31, 0
    %v108 = vsel %vm91, %v32, 0
    %v111 = vsel %vm91, %v33, 0
    %v114 = vsel %vm91, %v34, 0
    %116 = vmatprep.subr.mxu0 0.0
    %117 = vmatpush1.msra.mxu0 0.0
    %118 = vmatprep.subr.mxu0 0.0
    %119 = vmatpush1.msra.mxu0 0.0
    %120 = vmatprep.subr.mxu0 0.0
    %121 = vmatpush1.msra.mxu0 0.0
    %122 = vmatprep.subr.mxu0 0.0
    %123 = vmatpush1.msra.mxu0 0.0
    %124 = vmatprep.subr.mxu0 0.0
    %125 = vmatpush1.msra.mxu0 0.0
    %126 = vmatprep.subr.mxu0 0.0
    %127 = vmatpush1.msra.mxu0 0.0
    %128 = vmatprep.subr.mxu0 0.0
    %129 = vmatpush1.msra.mxu0 0.0
    %130 = vmatprep.subr.mxu0 0.0
    %131 = vmatpush1.msra.mxu0 0.0
    %132 = vmatprep.subr.mxu0 0.0
    %133 = vmatpush1.msra.mxu0 0.0
    %134 = vmatprep.subr.mxu0 0.0
    %135 = vmatpush1.msra.mxu0 0.0
    %136 = vmatprep.subr.mxu0 0.0
    %137 = vmatpush1.msra.mxu0 0.0
    %138 = vmatprep.subr.mxu0 0.0
    %139 = vmatpush1.msra.mxu0 0.0
    %140 = vmatprep.subr.mxu0 0.0
    %141 = vmatpush1.msra.mxu0 0.0
    %142 = vmatprep.subr.mxu0 0.0
    %143 = vmatpush1.msra.mxu0 0.0
    %144 = vmatprep.subr.mxu0 0.0
    %145 = vmatpush1.msra.mxu0 0.0
    %146 = vmatprep.subr.mxu0 %v88
    %147 = vmatpush1.msra.mxu0 %v87
    %148 = vmatprep.subr.mxu0 0.0
    %149 = vmatpush2.msra.mxu0 0.0
    %150 = vmatprep.subr.mxu0 0.0
    %151 = vmatpush2.msra.mxu0 0.0
    %152 = vmatprep.subr.mxu0 0.0
    %153 = vmatpush2.msra.mxu0 0.0
    %154 = vmatprep.subr.mxu0 0.0
    %155 = vmatpush2.msra.mxu0 0.0
    %156 = vmatprep.subr.mxu0 0.0
    %157 = vmatpush2.msra.mxu0 0.0
    %158 = vmatprep.subr.mxu0 0.0
    %159 = vmatpush2.msra.mxu0 0.0
    %160 = vmatprep.subr.mxu0 0.0
    %161 = vmatpush2.msra.mxu0 0.0
    %162 = vmatprep.subr.mxu0 0.0
    %163 = vmatpush2.msra.mxu0 0.0
    %164 = vmatprep.subr.mxu0 0.0
    %165 = vmatpush2.msra.mxu0 0.0
    %166 = vmatprep.subr.mxu0 0.0
    %167 = vmatpush2.msra.mxu0 0.0
    %168 = vmatprep.subr.mxu0 0.0
    %169 = vmatpush2.msra.mxu0 0.0
    %170 = vmatprep.subr.mxu0 0.0
    %171 = vmatpush2.msra.mxu0 0.0
    %172 = vmatprep.subr.mxu0 0.0
    %173 = vmatpush2.msra.mxu0 0.0
    %174 = vmatprep.subr.mxu0 0.0
    %175 = vmatpush2.msra.mxu0 0.0
    %176 = vmatprep.subr.mxu0 0.0
    %177 = vmatpush2.msra.mxu0 0.0
    %178 = vmatprep.subr.mxu0 0.0
    %179 = vmatpush2.msra.mxu0 0.0
    %180 = vmatprep.mubr.f32.mxu0 0.0
    %181 = vmatmul.mubr.f32.gmra.mxu0 %v93
    %v182 = vpop.f32.mrf.mxu0
    %v183 = vadd.f32 0.0, %v182
    %v184 = vpop.f32.mrf.mxu0
    %v185 = vadd.f32 0.0, %v184
    %186 = vmatprep.mubr.f32.mxu0 0.0
    %187 = vmatmul.mubr.f32.gmra.mxu0 %v96
    %v188 = vpop.f32.mrf.mxu0
    %v189 = vadd.f32 0.0, %v188
    %v190 = vpop.f32.mrf.mxu0
    %v191 = vadd.f32 0.0, %v190
    %192 = vmatprep.mubr.f32.mxu0 0.0
    %193 = vmatmul.mubr.f32.gmra.mxu0 %v99
    %v194 = vpop.f32.mrf.mxu0
    %v195 = vadd.f32 0.0, %v194
    %v196 = vpop.f32.mrf.mxu0
    %v197 = vadd.f32 0.0, %v196
    %198 = vmatprep.mubr.f32.mxu0 0.0
    %199 = vmatmul.mubr.f32.gmra.mxu0 %v102
    %v200 = vpop.f32.mrf.mxu0
    %v201 = vadd.f32 0.0, %v200
    %v202 = vpop.f32.mrf.mxu0
    %v203 = vadd.f32 0.0, %v202
    %204 = vmatprep.mubr.f32.mxu0 0.0
    %205 = vmatmul.mubr.f32.gmra.mxu0 %v105
    %v206 = vpop.f32.mrf.mxu0
    %v207 = vadd.f32 0.0, %v206
    %v208 = vpop.f32.mrf.mxu0
    %v209 = vadd.f32 0.0, %v208
    %210 = vmatprep.mubr.f32.mxu0 0.0
    %211 = vmatmul.mubr.f32.gmra.mxu0 %v108
    %v212 = vpop.f32.mrf.mxu0
    %v213 = vadd.f32 0.0, %v212
    %v214 = vpop.f32.mrf.mxu0
    %v215 = vadd.f32 0.0, %v214
    %216 = vmatprep.mubr.f32.mxu0 0.0
    %217 = vmatmul.mubr.f32.gmra.mxu0 %v111
    %v218 = vpop.f32.mrf.mxu0
    %v219 = vadd.f32 0.0, %v218
    %v220 = vpop.f32.mrf.mxu0
    %v221 = vadd.f32 0.0, %v220
    %222 = vmatprep.mubr.f32.mxu0 0.0
    %223 = vmatmul.mubr.f32.gmra.mxu0 %v114
    %v224 = vpop.f32.mrf.mxu0
    %v225 = vadd.f32 0.0, %v224
    %v226 = vpop.f32.mrf.mxu0
    %v227 = vadd.f32 0.0, %v226
    %228 = vdwg.mxu0
    %229 = vmatprep.subr.mxu0 0.0
    %230 = vmatpush1.msra.mxu0 0.0
    %231 = vmatprep.subr.mxu0 0.0
    %232 = vmatpush1.msra.mxu0 0.0
    %233 = vmatprep.subr.mxu0 0.0
    %234 = vmatpush1.msra.mxu0 0.0
    %235 = vmatprep.subr.mxu0 0.0
    %236 = vmatpush1.msra.mxu0 0.0
    %237 = vmatprep.subr.mxu0 0.0
    %238 = vmatpush1.msra.mxu0 0.0
    %239 = vmatprep.subr.mxu0 0.0
    %240 = vmatpush1.msra.mxu0 0.0
    %241 = vmatprep.subr.mxu0 0.0
    %242 = vmatpush1.msra.mxu0 0.0
    %243 = vmatprep.subr.mxu0 0.0
    %244 = vmatpush1.msra.mxu0 0.0
    %245 = vmatprep.subr.mxu0 0.0
    %246 = vmatpush1.msra.mxu0 0.0
    %247 = vmatprep.subr.mxu0 0.0
    %248 = vmatpush1.msra.mxu0 0.0
    %249 = vmatprep.subr.mxu0 0.0
    %250 = vmatpush1.msra.mxu0 0.0
    %251 = vmatprep.subr.mxu0 0.0
    %252 = vmatpush1.msra.mxu0 0.0
    %253 = vmatprep.subr.mxu0 0.0
    %254 = vmatpush1.msra.mxu0 0.0
    %255 = vmatprep.subr.mxu0 0.0
    %256 = vmatpush1.msra.mxu0 0.0
    %257 = vmatprep.subr.mxu0 0.0
    %258 = vmatpush1.msra.mxu0 0.0
    %259 = vmatprep.subr.mxu0 %v90
    %260 = vmatpush1.msra.mxu0 %v89
    %261 = vmatprep.subr.mxu0 0.0
    %262 = vmatpush2.msra.mxu0 0.0
    %263 = vmatprep.subr.mxu0 0.0
    %264 = vmatpush2.msra.mxu0 0.0
    %265 = vmatprep.subr.mxu0 0.0
    %266 = vmatpush2.msra.mxu0 0.0
    %267 = vmatprep.subr.mxu0 0.0
    %268 = vmatpush2.msra.mxu0 0.0
    %269 = vmatprep.subr.mxu0 0.0
    %270 = vmatpush2.msra.mxu0 0.0
    %271 = vmatprep.subr.mxu0 0.0
    %272 = vmatpush2.msra.mxu0 0.0
    %273 = vmatprep.subr.mxu0 0.0
    %274 = vmatpush2.msra.mxu0 0.0
    %275 = vmatprep.subr.mxu0 0.0
    %276 = vmatpush2.msra.mxu0 0.0
    %277 = vmatprep.subr.mxu0 0.0
    %278 = vmatpush2.msra.mxu0 0.0
    %279 = vmatprep.subr.mxu0 0.0
    %280 = vmatpush2.msra.mxu0 0.0
    %281 = vmatprep.subr.mxu0 0.0
    %282 = vmatpush2.msra.mxu0 0.0
    %283 = vmatprep.subr.mxu0 0.0
    %284 = vmatpush2.msra.mxu0 0.0
    %285 = vmatprep.subr.mxu0 0.0
    %286 = vmatpush2.msra.mxu0 0.0
    %287 = vmatprep.subr.mxu0 0.0
    %288 = vmatpush2.msra.mxu0 0.0
    %289 = vmatprep.subr.mxu0 0.0
    %290 = vmatpush2.msra.mxu0 0.0
    %291 = vmatprep.subr.mxu0 0.0
    %292 = vmatpush2.msra.mxu0 0.0
    %293 = vmatprep.mubr.f32.mxu0 0.0
    %294 = vmatmul.mubr.f32.gmra.mxu0 %v93
    %v295 = vpop.f32.mrf.mxu0
    %v296 = vadd.f32 0.0, %v295
    %v297 = vpop.f32.mrf.mxu0
    %v298 = vadd.f32 0.0, %v297
    %299 = vmatprep.mubr.f32.mxu0 0.0
    %300 = vmatmul.mubr.f32.gmra.mxu0 %v96
    %v301 = vpop.f32.mrf.mxu0
    %v302 = vadd.f32 0.0, %v301
    %v303 = vpop.f32.mrf.mxu0
    %v304 = vadd.f32 0.0, %v303
    %305 = vmatprep.mubr.f32.mxu0 0.0
    %306 = vmatmul.mubr.f32.gmra.mxu0 %v99
    %v307 = vpop.f32.mrf.mxu0
    %v308 = vadd.f32 0.0, %v307
    %v309 = vpop.f32.mrf.mxu0
    %v310 = vadd.f32 0.0, %v309
    %311 = vmatprep.mubr.f32.mxu0 0.0
    %312 = vmatmul.mubr.f32.gmra.mxu0 %v102
    %v313 = vpop.f32.mrf.mxu0
    %v314 = vadd.f32 0.0, %v313
    %v315 = vpop.f32.mrf.mxu0
    %v316 = vadd.f32 0.0, %v315
    %317 = vmatprep.mubr.f32.mxu0 0.0
    %318 = vmatmul.mubr.f32.gmra.mxu0 %v105
    %v319 = vpop.f32.mrf.mxu0
    %v320 = vadd.f32 0.0, %v319
    %v321 = vpop.f32.mrf.mxu0
    %v322 = vadd.f32 0.0, %v321
    %323 = vmatprep.mubr.f32.mxu0 0.0
    %324 = vmatmul.mubr.f32.gmra.mxu0 %v108
    %v325 = vpop.f32.mrf.mxu0
    %v326 = vadd.f32 0.0, %v325
    %v327 = vpop.f32.mrf.mxu0
    %v328 = vadd.f32 0.0, %v327
    %329 = vmatprep.mubr.f32.mxu0 0.0
    %330 = vmatmul.mubr.f32.gmra.mxu0 %v111
    %v331 = vpop.f32.mrf.mxu0
    %v332 = vadd.f32 0.0, %v331
    %v333 = vpop.f32.mrf.mxu0
    %v334 = vadd.f32 0.0, %v333
    %335 = vmatprep.mubr.f32.mxu0 0.0
    %336 = vmatmul.mubr.f32.gmra.mxu0 %v114
    %v337 = vpop.f32.mrf.mxu0
    %v338 = vadd.f32 0.0, %v337
    %v339 = vpop.f32.mrf.mxu0
    %v340 = vadd.f32 0.0, %v339
    %341 = vdwg.mxu0
    %v342 = vadd.f32 %v183, %v185
    %343 = vadd.xlane.f32.xlu0 %v342
    %v344 = vpop.xlane.xlu0 %343
    %v345 = vadd.f32 %v189, %v191
    %346 = vadd.xlane.f32.xlu0 %v345
    %v347 = vpop.xlane.xlu0 %346
    %v348 = vadd.f32 %v195, %v197
    %349 = vadd.xlane.f32.xlu0 %v348
    %v350 = vpop.xlane.xlu0 %349
    %v351 = vadd.f32 %v201, %v203
    %352 = vadd.xlane.f32.xlu0 %v351
    %v353 = vpop.xlane.xlu0 %352
    %v354 = vadd.f32 %v207, %v209
    %355 = vadd.xlane.f32.xlu0 %v354
    %v356 = vpop.xlane.xlu0 %355
    %v357 = vadd.f32 %v213, %v215
    %358 = vadd.xlane.f32.xlu0 %v357
    %v359 = vpop.xlane.xlu0 %358
    %v360 = vadd.f32 %v219, %v221
    %361 = vadd.xlane.f32.xlu0 %v360
    %v362 = vpop.xlane.xlu0 %361
    %v363 = vadd.f32 %v225, %v227
    %364 = vadd.xlane.f32.xlu0 %v363
    %v365 = vpop.xlane.xlu0 %364
    %v366 = vmul.f32 %v344, 0.00390625
    %v367 = vmul.f32 %v347, 0.00390625
    %v368 = vmul.f32 %v350, 0.00390625
    %v369 = vmul.f32 %v353, 0.00390625
    %v370 = vmul.f32 %v356, 0.00390625
    %v371 = vmul.f32 %v359, 0.00390625
    %v372 = vmul.f32 %v362, 0.00390625
    %v373 = vmul.f32 %v365, 0.00390625
    %v374 = vadd.f32 %v296, %v298
    %375 = vadd.xlane.f32.xlu0 %v374
    %v376 = vpop.xlane.xlu0 %375
    %v377 = vadd.f32 %v302, %v304
    %378 = vadd.xlane.f32.xlu0 %v377
    %v379 = vpop.xlane.xlu0 %378
    %v380 = vadd.f32 %v308, %v310
    %381 = vadd.xlane.f32.xlu0 %v380
    %v382 = vpop.xlane.xlu0 %381
    %v383 = vadd.f32 %v314, %v316
    %384 = vadd.xlane.f32.xlu0 %v383
    %v385 = vpop.xlane.xlu0 %384
    %v386 = vadd.f32 %v320, %v322
    %387 = vadd.xlane.f32.xlu0 %v386
    %v388 = vpop.xlane.xlu0 %387
    %v389 = vadd.f32 %v326, %v328
    %390 = vadd.xlane.f32.xlu0 %v389
    %v391 = vpop.xlane.xlu0 %390
    %v392 = vadd.f32 %v332, %v334
    %393 = vadd.xlane.f32.xlu0 %v392
    %v394 = vpop.xlane.xlu0 %393
    %v395 = vadd.f32 %v338, %v340
    %396 = vadd.xlane.f32.xlu0 %v395
    %v397 = vpop.xlane.xlu0 %396
    %v398 = vmul.f32 %v376, 0.00390625
    %v399 = vmul.f32 %v379, 0.00390625
    %v400 = vmul.f32 %v382, 0.00390625
    %v401 = vmul.f32 %v385, 0.00390625
    %v402 = vmul.f32 %v388, 0.00390625
    %v403 = vmul.f32 %v391, 0.00390625
    %v404 = vmul.f32 %v394, 0.00390625
    %v405 = vmul.f32 %v397, 0.00390625
    %v406 = vmax.f32 %v183, %v185
    %407 = vmax.xlane.f32.xlu0 %v406
    %v408 = vpop.xlane.xlu0 %407
    %v409 = vmax.f32 %v189, %v191
    %410 = vmax.xlane.f32.xlu0 %v409
    %v411 = vpop.xlane.xlu0 %410
    %v412 = vmax.f32 %v195, %v197
    %413 = vmax.xlane.f32.xlu0 %v412
    %v414 = vpop.xlane.xlu0 %413
    %v415 = vmax.f32 %v201, %v203
    %416 = vmax.xlane.f32.xlu0 %v415
    %v417 = vpop.xlane.xlu0 %416
    %v418 = vmax.f32 %v207, %v209
    %419 = vmax.xlane.f32.xlu0 %v418
    %v420 = vpop.xlane.xlu0 %419
    %v421 = vmax.f32 %v213, %v215
    %422 = vmax.xlane.f32.xlu0 %v421
    %v423 = vpop.xlane.xlu0 %422
    %v424 = vmax.f32 %v219, %v221
    %425 = vmax.xlane.f32.xlu0 %v424
    %v426 = vpop.xlane.xlu0 %425
    %v427 = vmax.f32 %v225, %v227
    %428 = vmax.xlane.f32.xlu0 %v427
    %v429 = vpop.xlane.xlu0 %428
    %v430 = vmax.f32 %v296, %v298
    %431 = vmax.xlane.f32.xlu0 %v430
    %v432 = vpop.xlane.xlu0 %431
    %v433 = vmax.f32 %v302, %v304
    %434 = vmax.xlane.f32.xlu0 %v433
    %v435 = vpop.xlane.xlu0 %434
    %v436 = vmax.f32 %v308, %v310
    %437 = vmax.xlane.f32.xlu0 %v436
    %v438 = vpop.xlane.xlu0 %437
    %v439 = vmax.f32 %v314, %v316
    %440 = vmax.xlane.f32.xlu0 %v439
    %v441 = vpop.xlane.xlu0 %440
    %v442 = vmax.f32 %v320, %v322
    %443 = vmax.xlane.f32.xlu0 %v442
    %v444 = vpop.xlane.xlu0 %443
    %v445 = vmax.f32 %v326, %v328
    %446 = vmax.xlane.f32.xlu0 %v445
    %v447 = vpop.xlane.xlu0 %446
    %v448 = vmax.f32 %v332, %v334
    %449 = vmax.xlane.f32.xlu0 %v448
    %v450 = vpop.xlane.xlu0 %449
    %v451 = vmax.f32 %v338, %v340
    %452 = vmax.xlane.f32.xlu0 %v451
    %v453 = vpop.xlane.xlu0 %452
    %vm454 = vcmask 7168
    %v455 = vsel %vm454, %v366, %v398
    %v456 = vsel %vm454, %v367, %v399
    %v457 = vsel %vm454, %v368, %v400
    %v458 = vsel %vm454, %v369, %v401
    %v459 = vsel %vm454, %v370, %v402
    %v460 = vsel %vm454, %v371, %v403
    %v461 = vsel %vm454, %v372, %v404
    %v462 = vsel %vm454, %v373, %v405
    %vm463 = vcmask 15360
    %v464 = vsel %vm463, %v455, %v408
    %v465 = vsel %vm463, %v456, %v411
    %v466 = vsel %vm463, %v457, %v414
    %v467 = vsel %vm463, %v458, %v417
    %v468 = vsel %vm463, %v459, %v420
    %v469 = vsel %vm463, %v460, %v423
    %v470 = vsel %vm463, %v461, %v426
    %v471 = vsel %vm463, %v462, %v429
    %vm472 = vcmask 23552
    %v473 = vsel %vm472, %v464, %v432
    %v474 = vsel %vm472, %v465, %v435
    %v475 = vsel %vm472, %v466, %v438
    %v476 = vsel %vm472, %v467, %v441
    %v477 = vsel %vm472, %v468, %v444
    %v478 = vsel %vm472, %v469, %v447
    %v479 = vsel %vm472, %v470, %v450
    %v480 = vsel %vm472, %v471, %v453
    %vm481 = vcmask 523264
    %v483 = vsel %vm481, %v51, 0
    %485 = vmatprep.subr.mxu0 0.0
    %486 = vmatpush1.msra.mxu0 0.0
    %487 = vmatprep.subr.mxu0 0.0
    %488 = vmatpush1.msra.mxu0 0.0
    %489 = vmatprep.subr.mxu0 0.0
    %490 = vmatpush1.msra.mxu0 0.0
    %491 = vmatprep.subr.mxu0 0.0
    %492 = vmatpush1.msra.mxu0 0.0
    %493 = vmatprep.subr.mxu0 0.0
    %494 = vmatpush1.msra.mxu0 0.0
    %495 = vmatprep.subr.mxu0 0.0
    %496 = vmatpush1.msra.mxu0 0.0
    %497 = vmatprep.subr.mxu0 0.0
    %498 = vmatpush1.msra.mxu0 0.0
    %499 = vmatprep.subr.mxu0 0.0
    %500 = vmatpush1.msra.mxu0 0.0
    %501 = vmatprep.subr.mxu0 0.0
    %502 = vmatpush1.msra.mxu0 %v480
    %503 = vmatprep.subr.mxu0 0.0
    %504 = vmatpush1.msra.mxu0 %v479
    %505 = vmatprep.subr.mxu0 0.0
    %506 = vmatpush1.msra.mxu0 %v478
    %507 = vmatprep.subr.mxu0 0.0
    %508 = vmatpush1.msra.mxu0 %v477
    %509 = vmatprep.subr.mxu0 0.0
    %510 = vmatpush1.msra.mxu0 %v476
    %511 = vmatprep.subr.mxu0 0.0
    %512 = vmatpush1.msra.mxu0 %v475
    %513 = vmatprep.subr.mxu0 0.0
    %514 = vmatpush1.msra.mxu0 %v474
    %515 = vmatprep.subr.mxu0 0.0
    %516 = vmatpush1.msra.mxu0 %v473
    %517 = vmatprep.subr.mxu0 0.0
    %518 = vmatpush2.msra.mxu0 0.0
    %519 = vmatprep.subr.mxu0 0.0
    %520 = vmatpush2.msra.mxu0 0.0
    %521 = vmatprep.subr.mxu0 0.0
    %522 = vmatpush2.msra.mxu0 0.0
    %523 = vmatprep.subr.mxu0 0.0
    %524 = vmatpush2.msra.mxu0 0.0
    %525 = vmatprep.subr.mxu0 0.0
    %526 = vmatpush2.msra.mxu0 0.0
    %527 = vmatprep.subr.mxu0 0.0
    %528 = vmatpush2.msra.mxu0 0.0
    %529 = vmatprep.subr.mxu0 0.0
    %530 = vmatpush2.msra.mxu0 0.0
    %531 = vmatprep.subr.mxu0 0.0
    %532 = vmatpush2.msra.mxu0 0.0
    %533 = vmatprep.subr.mxu0 0.0
    %534 = vmatpush2.msra.mxu0 0.0
    %535 = vmatprep.subr.mxu0 0.0
    %536 = vmatpush2.msra.mxu0 0.0
    %537 = vmatprep.subr.mxu0 0.0
    %538 = vmatpush2.msra.mxu0 0.0
    %539 = vmatprep.subr.mxu0 0.0
    %540 = vmatpush2.msra.mxu0 0.0
    %541 = vmatprep.subr.mxu0 0.0
    %542 = vmatpush2.msra.mxu0 0.0
    %543 = vmatprep.subr.mxu0 0.0
    %544 = vmatpush2.msra.mxu0 0.0
    %545 = vmatprep.subr.mxu0 0.0
    %546 = vmatpush2.msra.mxu0 0.0
    %547 = vmatprep.subr.mxu0 0.0
    %548 = vmatpush2.msra.mxu0 0.0
    %549 = vmatprep.mubr.f32.mxu0 0.0
    %550 = vmatmul.mubr.f32.gmra.mxu0 %v483
    %v551 = vpop.f32.mrf.mxu0
    %v552 = vadd.f32 0.0, %v551
    %v553 = vpop.f32.mrf.mxu0
    %554 = vdwg.mxu0
    %v555 = vmax.f32 %v552, 0.0
    %vm556 = vcmask 31744
    %v558 = vsel %vm556, %v35, 0
    %v561 = vsel %vm556, %v36, 0
    %v564 = vsel %vm556, %v37, 0
    %v567 = vsel %vm556, %v38, 0
    %v570 = vsel %vm556, %v39, 0
    %v573 = vsel %vm556, %v40, 0
    %v576 = vsel %vm556, %v41, 0
    %v579 = vsel %vm556, %v42, 0
    %vm581 = vcmask 1043456
    %v583 = vsel %vm581, %v555, 0
    %585 = vmatprep.subr.mxu0 0.0
    %586 = vmatpush1.msra.mxu0 0.0
    %587 = vmatprep.subr.mxu0 0.0
    %588 = vmatpush1.msra.mxu0 0.0
    %589 = vmatprep.subr.mxu0 0.0
    %590 = vmatpush1.msra.mxu0 0.0
    %591 = vmatprep.subr.mxu0 0.0
    %592 = vmatpush1.msra.mxu0 0.0
    %593 = vmatprep.subr.mxu0 0.0
    %594 = vmatpush1.msra.mxu0 0.0
    %595 = vmatprep.subr.mxu0 0.0
    %596 = vmatpush1.msra.mxu0 0.0
    %597 = vmatprep.subr.mxu0 0.0
    %598 = vmatpush1.msra.mxu0 0.0
    %599 = vmatprep.subr.mxu0 0.0
    %600 = vmatpush1.msra.mxu0 0.0
    %601 = vmatprep.subr.mxu0 0.0
    %602 = vmatpush1.msra.mxu0 0.0
    %603 = vmatprep.subr.mxu0 0.0
    %604 = vmatpush1.msra.mxu0 0.0
    %605 = vmatprep.subr.mxu0 0.0
    %606 = vmatpush1.msra.mxu0 0.0
    %607 = vmatprep.subr.mxu0 0.0
    %608 = vmatpush1.msra.mxu0 0.0
    %609 = vmatprep.subr.mxu0 0.0
    %610 = vmatpush1.msra.mxu0 0.0
    %611 = vmatprep.subr.mxu0 0.0
    %612 = vmatpush1.msra.mxu0 0.0
    %613 = vmatprep.subr.mxu0 0.0
    %614 = vmatpush1.msra.mxu0 0.0
    %615 = vmatprep.subr.mxu0 0.0
    %616 = vmatpush1.msra.mxu0 %v583
    %617 = vmatprep.subr.mxu0 0.0
    %618 = vmatpush2.msra.mxu0 0.0
    %619 = vmatprep.subr.mxu0 0.0
    %620 = vmatpush2.msra.mxu0 0.0
    %621 = vmatprep.subr.mxu0 0.0
    %622 = vmatpush2.msra.mxu0 0.0
    %623 = vmatprep.subr.mxu0 0.0
    %624 = vmatpush2.msra.mxu0 0.0
    %625 = vmatprep.subr.mxu0 0.0
    %626 = vmatpush2.msra.mxu0 0.0
    %627 = vmatprep.subr.mxu0 0.0
    %628 = vmatpush2.msra.mxu0 0.0
    %629 = vmatprep.subr.mxu0 0.0
    %630 = vmatpush2.msra.mxu0 0.0
    %631 = vmatprep.subr.mxu0 0.0
    %632 = vmatpush2.msra.mxu0 0.0
    %633 = vmatprep.subr.mxu0 0.0
    %634 = vmatpush2.msra.mxu0 0.0
    %635 = vmatprep.subr.mxu0 0.0
    %636 = vmatpush2.msra.mxu0 0.0
    %637 = vmatprep.subr.mxu0 0.0
    %638 = vmatpush2.msra.mxu0 0.0
    %639 = vmatprep.subr.mxu0 0.0
    %640 = vmatpush2.msra.mxu0 0.0
    %641 = vmatprep.subr.mxu0 0.0
    %642 = vmatpush2.msra.mxu0 0.0
    %643 = vmatprep.subr.mxu0 0.0
    %644 = vmatpush2.msra.mxu0 0.0
    %645 = vmatprep.subr.mxu0 0.0
    %646 = vmatpush2.msra.mxu0 0.0
    %647 = vmatprep.subr.mxu0 0.0
    %648 = vmatpush2.msra.mxu0 0.0
    %649 = vmatprep.mubr.f32.mxu0 0.0
    %650 = vmatmul.mubr.f32.gmra.mxu0 %v558
    %v651 = vpop.f32.mrf.mxu0
    %v652 = vadd.f32 0.0, %v651
    %v653 = vpop.f32.mrf.mxu0
    %654 = vmatprep.mubr.f32.mxu0 0.0
    %655 = vmatmul.mubr.f32.gmra.mxu0 %v561
    %v656 = vpop.f32.mrf.mxu0
    %v657 = vadd.f32 0.0, %v656
    %v658 = vpop.f32.mrf.mxu0
    %659 = vmatprep.mubr.f32.mxu0 0.0
    %660 = vmatmul.mubr.f32.gmra.mxu0 %v564
    %v661 = vpop.f32.mrf.mxu0
    %v662 = vadd.f32 0.0, %v661
    %v663 = vpop.f32.mrf.mxu0
    %664 = vmatprep.mubr.f32.mxu0 0.0
    %665 = vmatmul.mubr.f32.gmra.mxu0 %v567
    %v666 = vpop.f32.mrf.mxu0
    %v667 = vadd.f32 0.0, %v666
    %v668 = vpop.f32.mrf.mxu0
    %669 = vmatprep.mubr.f32.mxu0 0.0
    %670 = vmatmul.mubr.f32.gmra.mxu0 %v570
    %v671 = vpop.f32.mrf.mxu0
    %v672 = vadd.f32 0.0, %v671
    %v673 = vpop.f32.mrf.mxu0
    %674 = vmatprep.mubr.f32.mxu0 0.0
    %675 = vmatmul.mubr.f32.gmra.mxu0 %v573
    %v676 = vpop.f32.mrf.mxu0
    %v677 = vadd.f32 0.0, %v676
    %v678 = vpop.f32.mrf.mxu0
    %679 = vmatprep.mubr.f32.mxu0 0.0
    %680 = vmatmul.mubr.f32.gmra.mxu0 %v576
    %v681 = vpop.f32.mrf.mxu0
    %v682 = vadd.f32 0.0, %v681
    %v683 = vpop.f32.mrf.mxu0
    %684 = vmatprep.mubr.f32.mxu0 0.0
    %685 = vmatmul.mubr.f32.gmra.mxu0 %v579
    %v686 = vpop.f32.mrf.mxu0
    %v687 = vadd.f32 0.0, %v686
    %v688 = vpop.f32.mrf.mxu0
    %689 = vdwg.mxu0
    %698 = vrot.lane.b32.xlu0 %v652, 126
    %v699 = vpop.permute.xlu0 %698
    %700 = vrot.lane.b32.xlu0 %v657, 126
    %v701 = vpop.permute.xlu0 %700
    %702 = vrot.lane.b32.xlu0 %v662, 126
    %v703 = vpop.permute.xlu0 %702
    %704 = vrot.lane.b32.xlu0 %v667, 126
    %v705 = vpop.permute.xlu0 %704
    %706 = vrot.lane.b32.xlu0 %v672, 126
    %v707 = vpop.permute.xlu0 %706
    %708 = vrot.lane.b32.xlu0 %v677, 126
    %v709 = vpop.permute.xlu0 %708
    %710 = vrot.lane.b32.xlu0 %v682, 126
    %v711 = vpop.permute.xlu0 %710
    %712 = vrot.lane.b32.xlu0 %v687, 126
    %v713 = vpop.permute.xlu0 %712
    %v722 = vadd.f32 %v652, %v699
    %v723 = vadd.f32 %v657, %v701
    %v724 = vadd.f32 %v662, %v703
    %v725 = vadd.f32 %v667, %v705
    %v726 = vadd.f32 %v672, %v707
    %v727 = vadd.f32 %v677, %v709
    %v728 = vadd.f32 %v682, %v711
    %v729 = vadd.f32 %v687, %v713
    %v730 = vxor.u32 %v722, 2147483648
    %v731 = vxor.u32 %v723, 2147483648
    %v732 = vxor.u32 %v724, 2147483648
    %v733 = vxor.u32 %v725, 2147483648
    %v734 = vxor.u32 %v726, 2147483648
    %v735 = vxor.u32 %v727, 2147483648
    %v736 = vxor.u32 %v728, 2147483648
    %v737 = vxor.u32 %v729, 2147483648
    %v738 = vmul.f32 %v730, 1.442695
    %v739 = vpow.pop %v738
    %v740 = vmul.f32 %v731, 1.442695
    %v741 = vpow.pop %v740
    %v742 = vmul.f32 %v732, 1.442695
    %v743 = vpow.pop %v742
    %v744 = vmul.f32 %v733, 1.442695
    %v745 = vpow.pop %v744
    %v746 = vmul.f32 %v734, 1.442695
    %v747 = vpow.pop %v746
    %v748 = vmul.f32 %v735, 1.442695
    %v749 = vpow.pop %v748
    %v750 = vmul.f32 %v736, 1.442695
    %v751 = vpow.pop %v750
    %v752 = vmul.f32 %v737, 1.442695
    %v753 = vpow.pop %v752
    %v754 = vadd.f32 %v739, 1.0
    %v755 = vadd.f32 %v741, 1.0
    %v756 = vadd.f32 %v743, 1.0
    %v757 = vadd.f32 %v745, 1.0
    %v758 = vadd.f32 %v747, 1.0
    %v759 = vadd.f32 %v749, 1.0
    %v760 = vadd.f32 %v751, 1.0
    %v761 = vadd.f32 %v753, 1.0
    %v762 = vrcp.pop %v754
    %v763 = vmul.f32 1.0, %v762
    %v764 = vrcp.pop %v755
    %v765 = vmul.f32 1.0, %v764
    %v766 = vrcp.pop %v756
    %v767 = vmul.f32 1.0, %v766
    %v768 = vrcp.pop %v757
    %v769 = vmul.f32 1.0, %v768
    %v770 = vrcp.pop %v758
    %v771 = vmul.f32 1.0, %v770
    %v772 = vrcp.pop %v759
    %v773 = vmul.f32 1.0, %v772
    %v774 = vrcp.pop %v760
    %v775 = vmul.f32 1.0, %v774
    %v776 = vrcp.pop %v761
    %v777 = vmul.f32 1.0, %v776
    %779 = vset.pattern.permute.xlu0 0
    %780 = vperm.xlu0 %779, %v763
    %v781 = vpop.permute.xlu0 %780
    %784 = vset.pattern.permute.xlu0 0
    %785 = vperm.xlu0 %784, %v765
    %v786 = vpop.permute.xlu0 %785
    %789 = vset.pattern.permute.xlu0 0
    %790 = vperm.xlu0 %789, %v767
    %v791 = vpop.permute.xlu0 %790
    %794 = vset.pattern.permute.xlu0 0
    %795 = vperm.xlu0 %794, %v769
    %v796 = vpop.permute.xlu0 %795
    %799 = vset.pattern.permute.xlu0 0
    %800 = vperm.xlu0 %799, %v771
    %v801 = vpop.permute.xlu0 %800
    %804 = vset.pattern.permute.xlu0 0
    %805 = vperm.xlu0 %804, %v773
    %v806 = vpop.permute.xlu0 %805
    %809 = vset.pattern.permute.xlu0 0
    %810 = vperm.xlu0 %809, %v775
    %v811 = vpop.permute.xlu0 %810
    %814 = vset.pattern.permute.xlu0 0
    %815 = vperm.xlu0 %814, %v777
    %v816 = vpop.permute.xlu0 %815
    %v818 = vmul.f32 %v183, %v781
    %v819 = vmul.f32 %v185, %v781
    %v820 = vmul.f32 %v189, %v786
    %v821 = vmul.f32 %v191, %v786
    %v822 = vmul.f32 %v195, %v791
    %v823 = vmul.f32 %v197, %v791
    %v824 = vmul.f32 %v201, %v796
    %v825 = vmul.f32 %v203, %v796
    %v826 = vmul.f32 %v207, %v801
    %v827 = vmul.f32 %v209, %v801
    %v828 = vmul.f32 %v213, %v806
    %v829 = vmul.f32 %v215, %v806
    %v830 = vmul.f32 %v219, %v811
    %v831 = vmul.f32 %v221, %v811
    %v832 = vmul.f32 %v225, %v816
    %v833 = vmul.f32 %v227, %v816
    %834 = vset.pattern.permute.xlu0 1
    %835 = vperm.xlu0 %834, %v763
    %v836 = vpop.permute.xlu0 %835
    %838 = vset.pattern.permute.xlu0 1
    %839 = vperm.xlu0 %838, %v765
    %v840 = vpop.permute.xlu0 %839
    %842 = vset.pattern.permute.xlu0 1
    %843 = vperm.xlu0 %842, %v767
    %v844 = vpop.permute.xlu0 %843
    %846 = vset.pattern.permute.xlu0 1
    %847 = vperm.xlu0 %846, %v769
    %v848 = vpop.permute.xlu0 %847
    %850 = vset.pattern.permute.xlu0 1
    %851 = vperm.xlu0 %850, %v771
    %v852 = vpop.permute.xlu0 %851
    %854 = vset.pattern.permute.xlu0 1
    %855 = vperm.xlu0 %854, %v773
    %v856 = vpop.permute.xlu0 %855
    %858 = vset.pattern.permute.xlu0 1
    %859 = vperm.xlu0 %858, %v775
    %v860 = vpop.permute.xlu0 %859
    %862 = vset.pattern.permute.xlu0 1
    %863 = vperm.xlu0 %862, %v777
    %v864 = vpop.permute.xlu0 %863
    %v866 = vmul.f32 %v296, %v836
    %v867 = vmul.f32 %v298, %v836
    %v868 = vmul.f32 %v302, %v840
    %v869 = vmul.f32 %v304, %v840
    %v870 = vmul.f32 %v308, %v844
    %v871 = vmul.f32 %v310, %v844
    %v872 = vmul.f32 %v314, %v848
    %v873 = vmul.f32 %v316, %v848
    %v874 = vmul.f32 %v320, %v852
    %v875 = vmul.f32 %v322, %v852
    %v876 = vmul.f32 %v326, %v856
    %v877 = vmul.f32 %v328, %v856
    %v878 = vmul.f32 %v332, %v860
    %v879 = vmul.f32 %v334, %v860
    %v880 = vmul.f32 %v338, %v864
    %v881 = vmul.f32 %v340, %v864
    %v882 = vadd.f32 %v818, %v820
    %v883 = vadd.f32 %v882, %v822
    %v884 = vadd.f32 %v883, %v824
    %v885 = vadd.f32 %v884, %v826
    %v886 = vadd.f32 %v885, %v828
    %v887 = vadd.f32 %v886, %v830
    %v888 = vadd.f32 %v887, %v832
    %v889 = vrot.slane %v888, 4
    %v890 = vadd.f32 %v888, %v889
    %v891 = vrot.slane %v890, 2
    %v892 = vadd.f32 %v890, %v891
    %v893 = vrot.slane %v892, 1
    %v894 = vadd.f32 %v892, %v893
    %v895 = vadd.f32 %v819, %v821
    %v896 = vadd.f32 %v895, %v823
    %v897 = vadd.f32 %v896, %v825
    %v898 = vadd.f32 %v897, %v827
    %v899 = vadd.f32 %v898, %v829
    %v900 = vadd.f32 %v899, %v831
    %v901 = vadd.f32 %v900, %v833
    %v902 = vrot.slane %v901, 4
    %v903 = vadd.f32 %v901, %v902
    %v904 = vrot.slane %v903, 2
    %v905 = vadd.f32 %v903, %v904
    %v906 = vrot.slane %v905, 1
    %v907 = vadd.f32 %v905, %v906
    %v908 = vadd.f32 %v866, %v868
    %v909 = vadd.f32 %v908, %v870
    %v910 = vadd.f32 %v909, %v872
    %v911 = vadd.f32 %v910, %v874
    %v912 = vadd.f32 %v911, %v876
    %v913 = vadd.f32 %v912, %v878
    %v914 = vadd.f32 %v913, %v880
    %v915 = vrot.slane %v914, 4
    %v916 = vadd.f32 %v914, %v915
    %v917 = vrot.slane %v916, 2
    %v918 = vadd.f32 %v916, %v917
    %v919 = vrot.slane %v918, 1
    %v920 = vadd.f32 %v918, %v919
    %v921 = vadd.f32 %v867, %v869
    %v922 = vadd.f32 %v921, %v871
    %v923 = vadd.f32 %v922, %v873
    %v924 = vadd.f32 %v923, %v875
    %v925 = vadd.f32 %v924, %v877
    %v926 = vadd.f32 %v925, %v879
    %v927 = vadd.f32 %v926, %v881
    %v928 = vrot.slane %v927, 4
    %v929 = vadd.f32 %v927, %v928
    %v930 = vrot.slane %v929, 2
    %v931 = vadd.f32 %v929, %v930
    %v932 = vrot.slane %v931, 1
    %v933 = vadd.f32 %v931, %v932
    %v934 = vmul.f32 %v894, 0.015625
    %v935 = vmul.f32 %v907, 0.015625
    %v936 = vmul.f32 %v920, 0.015625
    %v937 = vmul.f32 %v933, 0.015625
    %v938 = vmax.f32 %v818, %v820
    %v939 = vmax.f32 %v938, %v822
    %v940 = vmax.f32 %v939, %v824
    %v941 = vmax.f32 %v940, %v826
    %v942 = vmax.f32 %v941, %v828
    %v943 = vmax.f32 %v942, %v830
    %v944 = vmax.f32 %v943, %v832
    %v945 = vrot.slane %v944, 4
    %v946 = vmax.f32 %v944, %v945
    %v947 = vrot.slane %v946, 2
    %v948 = vmax.f32 %v946, %v947
    %v949 = vrot.slane %v948, 1
    %v950 = vmax.f32 %v948, %v949
    %v951 = vmax.f32 %v819, %v821
    %v952 = vmax.f32 %v951, %v823
    %v953 = vmax.f32 %v952, %v825
    %v954 = vmax.f32 %v953, %v827
    %v955 = vmax.f32 %v954, %v829
    %v956 = vmax.f32 %v955, %v831
    %v957 = vmax.f32 %v956, %v833
    %v958 = vrot.slane %v957, 4
    %v959 = vmax.f32 %v957, %v958
    %v960 = vrot.slane %v959, 2
    %v961 = vmax.f32 %v959, %v960
    %v962 = vrot.slane %v961, 1
    %v963 = vmax.f32 %v961, %v962
    %v964 = vmax.f32 %v866, %v868
    %v965 = vmax.f32 %v964, %v870
    %v966 = vmax.f32 %v965, %v872
    %v967 = vmax.f32 %v966, %v874
    %v968 = vmax.f32 %v967, %v876
    %v969 = vmax.f32 %v968, %v878
    %v970 = vmax.f32 %v969, %v880
    %v971 = vrot.slane %v970, 4
    %v972 = vmax.f32 %v970, %v971
    %v973 = vrot.slane %v972, 2
    %v974 = vmax.f32 %v972, %v973
    %v975 = vrot.slane %v974, 1
    %v976 = vmax.f32 %v974, %v975
    %v977 = vmax.f32 %v867, %v869
    %v978 = vmax.f32 %v977, %v871
    %v979 = vmax.f32 %v978, %v873
    %v980 = vmax.f32 %v979, %v875
    %v981 = vmax.f32 %v980, %v877
    %v982 = vmax.f32 %v981, %v879
    %v983 = vmax.f32 %v982, %v881
    %v984 = vrot.slane %v983, 4
    %v985 = vmax.f32 %v983, %v984
    %v986 = vrot.slane %v985, 2
    %v987 = vmax.f32 %v985, %v986
    %v988 = vrot.slane %v987, 1
    %v989 = vmax.f32 %v987, %v988
    %v994 = vrot.slane %v936, 7
    %v995 = vrot.slane %v937, 7
    %v996 = vrot.slane %v976, 7
    %v997 = vrot.slane %v989, 7
    %vm1002 = vcmask 1040384
    %v1003 = vsel %vm1002, %v934, %v994
    %v1004 = vsel %vm1002, %v935, %v995
    %v1005 = vsel %vm1002, %v950, %v996
    %v1006 = vsel %vm1002, %v963, %v997
    %s1007 = smul.u32 8, 72
    %s1008 = smul.u32 %s1007, 2
    %s1009 = sshll.u32 %s1008, 4
    %1010 = dma.done [#allocation3], %s1009
    %v1011 = vld [vmem:[#allocation2] sm:$0xff]
    %v1012 = vld [vmem:[#allocation2 + $0x8] sm:$0xff]
    %v1013 = vld [vmem:[#allocation2 + $0x10] sm:$0xff]
    %v1014 = vld [vmem:[#allocation2 + $0x18] sm:$0xff]
    %v1015 = vld [vmem:[#allocation2 + $0x20] sm:$0xff]
    %v1016 = vld [vmem:[#allocation2 + $0x28] sm:$0xff]
    %v1017 = vld [vmem:[#allocation2 + $0x30] sm:$0xff]
    %v1018 = vld [vmem:[#allocation2 + $0x38] sm:$0xff]
    %v1019 = vld [vmem:[#allocation2 + $0x40] sm:$0xff]
    %v1020 = vld [vmem:[#allocation2 + $0x48] sm:$0xff]
    %v1021 = vld [vmem:[#allocation2 + $0x50] sm:$0xff]
    %v1022 = vld [vmem:[#allocation2 + $0x58] sm:$0xff]
    %v1023 = vld [vmem:[#allocation2 + $0x60] sm:$0xff]
    %v1024 = vld [vmem:[#allocation2 + $0x68] sm:$0xff]
    %v1025 = vld [vmem:[#allocation2 + $0x70] sm:$0xff]
    %v1026 = vld [vmem:[#allocation2 + $0x78] sm:$0xff]
    %v1027 = vld [vmem:[#allocation2 + $0x80] sm:$0xff]
    %v1028 = vld [vmem:[#allocation2 + $0x88] sm:$0xff]
    %v1029 = vld [vmem:[#allocation2 + $0x90] sm:$0xff]
    %v1030 = vld [vmem:[#allocation2 + $0x98] sm:$0xff]
    %v1031 = vld [vmem:[#allocation2 + $0xa0] sm:$0xff]
    %v1032 = vld [vmem:[#allocation2 + $0xa8] sm:$0xff]
    %v1033 = vld [vmem:[#allocation2 + $0xb0] sm:$0xff]
    %v1034 = vld [vmem:[#allocation2 + $0xb8] sm:$0xff]
    %v1035 = vld [vmem:[#allocation2 + $0xc0] sm:$0xff]
    %v1036 = vld [vmem:[#allocation2 + $0xc8] sm:$0xff]
    %v1037 = vld [vmem:[#allocation2 + $0xd0] sm:$0xff]
    %v1038 = vld [vmem:[#allocation2 + $0xd8] sm:$0xff]
    %v1039 = vld [vmem:[#allocation2 + $0xe0] sm:$0xff]
    %v1040 = vld [vmem:[#allocation2 + $0xe8] sm:$0xff]
    %v1041 = vld [vmem:[#allocation2 + $0xf0] sm:$0xff]
    %v1042 = vld [vmem:[#allocation2 + $0xf8] sm:$0xff]
    %v1043 = vld [vmem:[#allocation2 + $0x100] sm:$0xff]
    %v1044 = vld [vmem:[#allocation2 + $0x108] sm:$0xff]
    %v1045 = vld [vmem:[#allocation2 + $0x110] sm:$0xff]
    %v1046 = vld [vmem:[#allocation2 + $0x118] sm:$0xff]
    %v1047 = vld [vmem:[#allocation2 + $0x120] sm:$0xff]
    %v1048 = vld [vmem:[#allocation2 + $0x128] sm:$0xff]
    %v1049 = vld [vmem:[#allocation2 + $0x130] sm:$0xff]
    %v1050 = vld [vmem:[#allocation2 + $0x138] sm:$0xff]
    %v1051 = vld [vmem:[#allocation2 + $0x140] sm:$0xff]
    %v1052 = vld [vmem:[#allocation2 + $0x148] sm:$0xff]
    %v1053 = vld [vmem:[#allocation2 + $0x150] sm:$0xff]
    %v1054 = vld [vmem:[#allocation2 + $0x158] sm:$0xff]
    %v1055 = vld [vmem:[#allocation2 + $0x160] sm:$0xff]
    %v1056 = vld [vmem:[#allocation2 + $0x168] sm:$0xff]
    %v1057 = vld [vmem:[#allocation2 + $0x170] sm:$0xff]
    %v1058 = vld [vmem:[#allocation2 + $0x178] sm:$0xff]
    %v1059 = vld [vmem:[#allocation2 + $0x180] sm:$0xff]
    %v1060 = vld [vmem:[#allocation2 + $0x188] sm:$0xff]
    %v1061 = vld [vmem:[#allocation2 + $0x190] sm:$0xff]
    %v1062 = vld [vmem:[#allocation2 + $0x198] sm:$0xff]
    %v1063 = vld [vmem:[#allocation2 + $0x1a0] sm:$0xff]
    %v1064 = vld [vmem:[#allocation2 + $0x1a8] sm:$0xff]
    %v1065 = vld [vmem:[#allocation2 + $0x1b0] sm:$0xff]
    %v1066 = vld [vmem:[#allocation2 + $0x1b8] sm:$0xff]
    %v1067 = vld [vmem:[#allocation2 + $0x1c0] sm:$0xff]
    %v1068 = vld [vmem:[#allocation2 + $0x1c8] sm:$0xff]
    %v1069 = vld [vmem:[#allocation2 + $0x1d0] sm:$0xff]
    %v1070 = vld [vmem:[#allocation2 + $0x1d8] sm:$0xff]
    %v1071 = vld [vmem:[#allocation2 + $0x1e0] sm:$0xff]
    %v1072 = vld [vmem:[#allocation2 + $0x1e8] sm:$0xff]
    %v1073 = vld [vmem:[#allocation2 + $0x1f0] sm:$0xff]
    %v1074 = vld [vmem:[#allocation2 + $0x1f8] sm:$0xff]
    %v1075 = vld [vmem:[#allocation2 + $0x200] sm:$0xff]
    %v1076 = vld [vmem:[#allocation2 + $0x208] sm:$0xff]
    %v1077 = vld [vmem:[#allocation2 + $0x210] sm:$0xff]
    %v1078 = vld [vmem:[#allocation2 + $0x218] sm:$0xff]
    %v1079 = vld [vmem:[#allocation2 + $0x220] sm:$0xff]
    %v1080 = vld [vmem:[#allocation2 + $0x228] sm:$0xff]
    %v1081 = vld [vmem:[#allocation2 + $0x230] sm:$0xff]
    %v1082 = vld [vmem:[#allocation2 + $0x238] sm:$0xff]
    %v1083 = vld [vmem:[#allocation2 + $0x240] sm:$0xff]
    %v1084 = vld [vmem:[#allocation2 + $0x248] sm:$0xff]
    %v1085 = vld [vmem:[#allocation2 + $0x250] sm:$0xff]
    %v1086 = vld [vmem:[#allocation2 + $0x258] sm:$0xff]
    %v1087 = vld [vmem:[#allocation2 + $0x260] sm:$0xff]
    %v1088 = vld [vmem:[#allocation2 + $0x268] sm:$0xff]
    %v1089 = vld [vmem:[#allocation2 + $0x270] sm:$0xff]
    %v1090 = vld [vmem:[#allocation2 + $0x278] sm:$0xff]
    %v1091 = vld [vmem:[#allocation2 + $0x280] sm:$0xff]
    %v1092 = vld [vmem:[#allocation2 + $0x288] sm:$0xff]
    %v1093 = vld [vmem:[#allocation2 + $0x290] sm:$0xff]
    %v1094 = vld [vmem:[#allocation2 + $0x298] sm:$0xff]
    %v1095 = vld [vmem:[#allocation2 + $0x2a0] sm:$0xff]
    %v1096 = vld [vmem:[#allocation2 + $0x2a8] sm:$0xff]
    %v1097 = vld [vmem:[#allocation2 + $0x2b0] sm:$0xff]
    %v1098 = vld [vmem:[#allocation2 + $0x2b8] sm:$0xff]
    %v1099 = vld [vmem:[#allocation2 + $0x2c0] sm:$0xff]
    %v1100 = vld [vmem:[#allocation2 + $0x2c8] sm:$0xff]
    %v1101 = vld [vmem:[#allocation2 + $0x2d0] sm:$0xff]
    %v1102 = vld [vmem:[#allocation2 + $0x2d8] sm:$0xff]
    %v1103 = vld [vmem:[#allocation2 + $0x2e0] sm:$0xff]
    %v1104 = vld [vmem:[#allocation2 + $0x2e8] sm:$0xff]
    %v1105 = vld [vmem:[#allocation2 + $0x2f0] sm:$0xff]
    %v1106 = vld [vmem:[#allocation2 + $0x2f8] sm:$0xff]
    %v1107 = vld [vmem:[#allocation2 + $0x300] sm:$0xff]
    %v1108 = vld [vmem:[#allocation2 + $0x308] sm:$0xff]
    %v1109 = vld [vmem:[#allocation2 + $0x310] sm:$0xff]
    %v1110 = vld [vmem:[#allocation2 + $0x318] sm:$0xff]
    %v1111 = vld [vmem:[#allocation2 + $0x320] sm:$0xff]
    %v1112 = vld [vmem:[#allocation2 + $0x328] sm:$0xff]
    %v1113 = vld [vmem:[#allocation2 + $0x330] sm:$0xff]
    %v1114 = vld [vmem:[#allocation2 + $0x338] sm:$0xff]
    %v1115 = vld [vmem:[#allocation2 + $0x340] sm:$0xff]
    %v1116 = vld [vmem:[#allocation2 + $0x348] sm:$0xff]
    %v1117 = vld [vmem:[#allocation2 + $0x350] sm:$0xff]
    %v1118 = vld [vmem:[#allocation2 + $0x358] sm:$0xff]
    %v1119 = vld [vmem:[#allocation2 + $0x360] sm:$0xff]
    %v1120 = vld [vmem:[#allocation2 + $0x368] sm:$0xff]
    %v1121 = vld [vmem:[#allocation2 + $0x370] sm:$0xff]
    %v1122 = vld [vmem:[#allocation2 + $0x378] sm:$0xff]
    %v1123 = vld [vmem:[#allocation2 + $0x380] sm:$0xff]
    %v1124 = vld [vmem:[#allocation2 + $0x388] sm:$0xff]
    %v1125 = vld [vmem:[#allocation2 + $0x390] sm:$0xff]
    %v1126 = vld [vmem:[#allocation2 + $0x398] sm:$0xff]
    %v1127 = vld [vmem:[#allocation2 + $0x3a0] sm:$0xff]
    %v1128 = vld [vmem:[#allocation2 + $0x3a8] sm:$0xff]
    %v1129 = vld [vmem:[#allocation2 + $0x3b0] sm:$0xff]
    %v1130 = vld [vmem:[#allocation2 + $0x3b8] sm:$0xff]
    %v1131 = vld [vmem:[#allocation2 + $0x3c0] sm:$0xff]
    %v1132 = vld [vmem:[#allocation2 + $0x3c8] sm:$0xff]
    %v1133 = vld [vmem:[#allocation2 + $0x3d0] sm:$0xff]
    %v1134 = vld [vmem:[#allocation2 + $0x3d8] sm:$0xff]
    %v1135 = vld [vmem:[#allocation2 + $0x3e0] sm:$0xff]
    %v1136 = vld [vmem:[#allocation2 + $0x3e8] sm:$0xff]
    %v1137 = vld [vmem:[#allocation2 + $0x3f0] sm:$0xff]
    %v1138 = vld [vmem:[#allocation2 + $0x3f8] sm:$0xff]
    %v1139 = vld [vmem:[#allocation2 + $0x400] sm:$0xff]
    %v1140 = vld [vmem:[#allocation2 + $0x408] sm:$0xff]
    %v1141 = vld [vmem:[#allocation2 + $0x410] sm:$0xff]
    %v1142 = vld [vmem:[#allocation2 + $0x418] sm:$0xff]
    %v1143 = vld [vmem:[#allocation2 + $0x420] sm:$0xff]
    %v1144 = vld [vmem:[#allocation2 + $0x428] sm:$0xff]
    %v1145 = vld [vmem:[#allocation2 + $0x430] sm:$0xff]
    %v1146 = vld [vmem:[#allocation2 + $0x438] sm:$0xff]
    %v1147 = vld [vmem:[#allocation2 + $0x440] sm:$0xff]
    %v1148 = vld [vmem:[#allocation2 + $0x448] sm:$0xff]
    %v1149 = vld [vmem:[#allocation2 + $0x450] sm:$0xff]
    %v1150 = vld [vmem:[#allocation2 + $0x458] sm:$0xff]
    %v1151 = vld [vmem:[#allocation2 + $0x460] sm:$0xff]
    %v1152 = vld [vmem:[#allocation2 + $0x468] sm:$0xff]
    %v1153 = vld [vmem:[#allocation2 + $0x470] sm:$0xff]
    %v1154 = vld [vmem:[#allocation2 + $0x478] sm:$0xff]
    %1155 = vmatprep.subr.mxu0 %v1042
    %1156 = vmatpush1.msra.mxu0 %v1041
    %1157 = vmatprep.subr.mxu0 %v1040
    %1158 = vmatpush1.msra.mxu0 %v1039
    %1159 = vmatprep.subr.mxu0 %v1038
    %1160 = vmatpush1.msra.mxu0 %v1037
    %1161 = vmatprep.subr.mxu0 %v1036
    %1162 = vmatpush1.msra.mxu0 %v1035
    %1163 = vmatprep.subr.mxu0 %v1034
    %1164 = vmatpush1.msra.mxu0 %v1033
    %1165 = vmatprep.subr.mxu0 %v1032
    %1166 = vmatpush1.msra.mxu0 %v1031
    %1167 = vmatprep.subr.mxu0 %v1030
    %1168 = vmatpush1.msra.mxu0 %v1029
    %1169 = vmatprep.subr.mxu0 %v1028
    %1170 = vmatpush1.msra.mxu0 %v1027
    %1171 = vmatprep.subr.mxu0 %v1026
    %1172 = vmatpush1.msra.mxu0 %v1025
    %1173 = vmatprep.subr.mxu0 %v1024
    %1174 = vmatpush1.msra.mxu0 %v1023
    %1175 = vmatprep.subr.mxu0 %v1022
    %1176 = vmatpush1.msra.mxu0 %v1021
    %1177 = vmatprep.subr.mxu0 %v1020
    %1178 = vmatpush1.msra.mxu0 %v1019
    %1179 = vmatprep.subr.mxu0 %v1018
    %1180 = vmatpush1.msra.mxu0 %v1017
    %1181 = vmatprep.subr.mxu0 %v1016
    %1182 = vmatpush1.msra.mxu0 %v1015
    %1183 = vmatprep.subr.mxu0 %v1014
    %1184 = vmatpush1.msra.mxu0 %v1013
    %1185 = vmatprep.subr.mxu0 %v1012
    %1186 = vmatpush1.msra.mxu0 %v1011
    %1187 = vmatprep.subr.mxu0 %v1074
    %1188 = vmatpush2.msra.mxu0 %v1073
    %1189 = vmatprep.subr.mxu0 %v1072
    %1190 = vmatpush2.msra.mxu0 %v1071
    %1191 = vmatprep.subr.mxu0 %v1070
    %1192 = vmatpush2.msra.mxu0 %v1069
    %1193 = vmatprep.subr.mxu0 %v1068
    %1194 = vmatpush2.msra.mxu0 %v1067
    %1195 = vmatprep.subr.mxu0 %v1066
    %1196 = vmatpush2.msra.mxu0 %v1065
    %1197 = vmatprep.subr.mxu0 %v1064
    %1198 = vmatpush2.msra.mxu0 %v1063
    %1199 = vmatprep.subr.mxu0 %v1062
    %1200 = vmatpush2.msra.mxu0 %v1061
    %1201 = vmatprep.subr.mxu0 %v1060
    %1202 = vmatpush2.msra.mxu0 %v1059
    %1203 = vmatprep.subr.mxu0 %v1058
    %1204 = vmatpush2.msra.mxu0 %v1057
    %1205 = vmatprep.subr.mxu0 %v1056
    %1206 = vmatpush2.msra.mxu0 %v1055
    %1207 = vmatprep.subr.mxu0 %v1054
    %1208 = vmatpush2.msra.mxu0 %v1053
    %1209 = vmatprep.subr.mxu0 %v1052
    %1210 = vmatpush2.msra.mxu0 %v1051
    %1211 = vmatprep.subr.mxu0 %v1050
    %1212 = vmatpush2.msra.mxu0 %v1049
    %1213 = vmatprep.subr.mxu0 %v1048
    %1214 = vmatpush2.msra.mxu0 %v1047
    %1215 = vmatprep.subr.mxu0 %v1046
    %1216 = vmatpush2.msra.mxu0 %v1045
    %1217 = vmatprep.subr.mxu0 %v1044
    %1218 = vmatpush2.msra.mxu0 %v1043
    %1219 = vmatprep.mubr.f32.mxu0 %v1004
    %1220 = vmatmul.mubr.f32.gmra.mxu0 %v1003
    %v1221 = vpop.f32.mrf.mxu0
    %v1222 = vadd.f32 0.0, %v1221
    %v1223 = vpop.f32.mrf.mxu0
    %v1224 = vadd.f32 0.0, %v1223
    %1225 = vdwg.mxu0
    %1226 = vmatprep.subr.mxu0 %v1106
    %1227 = vmatpush1.msra.mxu0 %v1105
    %1228 = vmatprep.subr.mxu0 %v1104
    %1229 = vmatpush1.msra.mxu0 %v1103
    %1230 = vmatprep.subr.mxu0 %v1102
    %1231 = vmatpush1.msra.mxu0 %v1101
    %1232 = vmatprep.subr.mxu0 %v1100
    %1233 = vmatpush1.msra.mxu0 %v1099
    %1234 = vmatprep.subr.mxu0 %v1098
    %1235 = vmatpush1.msra.mxu0 %v1097
    %1236 = vmatprep.subr.mxu0 %v1096
    %1237 = vmatpush1.msra.mxu0 %v1095
    %1238 = vmatprep.subr.mxu0 %v1094
    %1239 = vmatpush1.msra.mxu0 %v1093
    %1240 = vmatprep.subr.mxu0 %v1092
    %1241 = vmatpush1.msra.mxu0 %v1091
    %1242 = vmatprep.subr.mxu0 %v1090
    %1243 = vmatpush1.msra.mxu0 %v1089
    %1244 = vmatprep.subr.mxu0 %v1088
    %1245 = vmatpush1.msra.mxu0 %v1087
    %1246 = vmatprep.subr.mxu0 %v1086
    %1247 = vmatpush1.msra.mxu0 %v1085
    %1248 = vmatprep.subr.mxu0 %v1084
    %1249 = vmatpush1.msra.mxu0 %v1083
    %1250 = vmatprep.subr.mxu0 %v1082
    %1251 = vmatpush1.msra.mxu0 %v1081
    %1252 = vmatprep.subr.mxu0 %v1080
    %1253 = vmatpush1.msra.mxu0 %v1079
    %1254 = vmatprep.subr.mxu0 %v1078
    %1255 = vmatpush1.msra.mxu0 %v1077
    %1256 = vmatprep.subr.mxu0 %v1076
    %1257 = vmatpush1.msra.mxu0 %v1075
    %1258 = vmatprep.subr.mxu0 %v1138
    %1259 = vmatpush2.msra.mxu0 %v1137
    %1260 = vmatprep.subr.mxu0 %v1136
    %1261 = vmatpush2.msra.mxu0 %v1135
    %1262 = vmatprep.subr.mxu0 %v1134
    %1263 = vmatpush2.msra.mxu0 %v1133
    %1264 = vmatprep.subr.mxu0 %v1132
    %1265 = vmatpush2.msra.mxu0 %v1131
    %1266 = vmatprep.subr.mxu0 %v1130
    %1267 = vmatpush2.msra.mxu0 %v1129
    %1268 = vmatprep.subr.mxu0 %v1128
    %1269 = vmatpush2.msra.mxu0 %v1127
    %1270 = vmatprep.subr.mxu0 %v1126
    %1271 = vmatpush2.msra.mxu0 %v1125
    %1272 = vmatprep.subr.mxu0 %v1124
    %1273 = vmatpush2.msra.mxu0 %v1123
    %1274 = vmatprep.subr.mxu0 %v1122
    %1275 = vmatpush2.msra.mxu0 %v1121
    %1276 = vmatprep.subr.mxu0 %v1120
    %1277 = vmatpush2.msra.mxu0 %v1119
    %1278 = vmatprep.subr.mxu0 %v1118
    %1279 = vmatpush2.msra.mxu0 %v1117
    %1280 = vmatprep.subr.mxu0 %v1116
    %1281 = vmatpush2.msra.mxu0 %v1115
    %1282 = vmatprep.subr.mxu0 %v1114
    %1283 = vmatpush2.msra.mxu0 %v1113
    %1284 = vmatprep.subr.mxu0 %v1112
    %1285 = vmatpush2.msra.mxu0 %v1111
    %1286 = vmatprep.subr.mxu0 %v1110
    %1287 = vmatpush2.msra.mxu0 %v1109
    %1288 = vmatprep.subr.mxu0 %v1108
    %1289 = vmatpush2.msra.mxu0 %v1107
    %1290 = vmatprep.mubr.f32.mxu0 %v1006
    %1291 = vmatmul.mubr.f32.gmra.mxu0 %v1005
    %v1292 = vpop.f32.mrf.mxu0
    %v1293 = vadd.f32 %v1222, %v1292
    %v1294 = vpop.f32.mrf.mxu0
    %v1295 = vadd.f32 %v1224, %v1294
    %1296 = vdwg.mxu0
    %v1297 = vxor.u32 %v1293, 2147483648
    %v1298 = vxor.u32 %v1295, 2147483648
    %v1299 = vmul.f32 %v1297, 1.442695
    %v1300 = vpow.pop %v1299
    %v1301 = vmul.f32 %v1298, 1.442695
    %v1302 = vpow.pop %v1301
    %v1303 = vadd.f32 %v1300, 1.0
    %v1304 = vadd.f32 %v1302, 1.0
    %v1305 = vrcp.pop %v1303
    %v1306 = vmul.f32 1.0, %v1305
    %v1307 = vrcp.pop %v1304
    %v1308 = vmul.f32 1.0, %v1307
    %1309 = vmatprep.subr.mxu0 0.0
    %1310 = vmatpush1.xpose.msra.mxu0 0.0
    %1311 = vmatprep.subr.mxu0 0.0
    %1312 = vmatpush1.xpose.msra.mxu0 0.0
    %1313 = vmatprep.subr.mxu0 0.0
    %1314 = vmatpush1.xpose.msra.mxu0 0.0
    %1315 = vmatprep.subr.mxu0 0.0
    %1316 = vmatpush1.xpose.msra.mxu0 0.0
    %1317 = vmatprep.subr.mxu0 0.0
    %1318 = vmatpush1.xpose.msra.mxu0 0.0
    %1319 = vmatprep.subr.mxu0 0.0
    %1320 = vmatpush1.xpose.msra.mxu0 0.0
    %1321 = vmatprep.subr.mxu0 0.0
    %1322 = vmatpush1.xpose.msra.mxu0 0.0
    %1323 = vmatprep.subr.mxu0 0.0
    %1324 = vmatpush1.xpose.msra.mxu0 0.0
    %1325 = vmatprep.subr.mxu0 %v833
    %1326 = vmatpush1.xpose.msra.mxu0 %v832
    %1327 = vmatprep.subr.mxu0 %v831
    %1328 = vmatpush1.xpose.msra.mxu0 %v830
    %1329 = vmatprep.subr.mxu0 %v829
    %1330 = vmatpush1.xpose.msra.mxu0 %v828
    %1331 = vmatprep.subr.mxu0 %v827
    %1332 = vmatpush1.xpose.msra.mxu0 %v826
    %1333 = vmatprep.subr.mxu0 %v825
    %1334 = vmatpush1.xpose.msra.mxu0 %v824
    %1335 = vmatprep.subr.mxu0 %v823
    %1336 = vmatpush1.xpose.msra.mxu0 %v822
    %1337 = vmatprep.subr.mxu0 %v821
    %1338 = vmatpush1.xpose.msra.mxu0 %v820
    %1339 = vmatprep.subr.mxu0 %v819
    %1340 = vmatpush1.xpose.msra.mxu0 %v818
    %1341 = vmatprep.subr.mxu0 0.0
    %1342 = vmatpush2.xpose.msra.mxu0 0.0
    %1343 = vmatprep.subr.mxu0 0.0
    %1344 = vmatpush2.xpose.msra.mxu0 0.0
    %1345 = vmatprep.subr.mxu0 0.0
    %1346 = vmatpush2.xpose.msra.mxu0 0.0
    %1347 = vmatprep.subr.mxu0 0.0
    %1348 = vmatpush2.xpose.msra.mxu0 0.0
    %1349 = vmatprep.subr.mxu0 0.0
    %1350 = vmatpush2.xpose.msra.mxu0 0.0
    %1351 = vmatprep.subr.mxu0 0.0
    %1352 = vmatpush2.xpose.msra.mxu0 0.0
    %1353 = vmatprep.subr.mxu0 0.0
    %1354 = vmatpush2.xpose.msra.mxu0 0.0
    %1355 = vmatprep.subr.mxu0 0.0
    %1356 = vmatpush2.xpose.msra.mxu0 0.0
    %1357 = vmatprep.subr.mxu0 0.0
    %1358 = vmatpush2.xpose.msra.mxu0 0.0
    %1359 = vmatprep.subr.mxu0 0.0
    %1360 = vmatpush2.xpose.msra.mxu0 0.0
    %1361 = vmatprep.subr.mxu0 0.0
    %1362 = vmatpush2.xpose.msra.mxu0 0.0
    %1363 = vmatprep.subr.mxu0 0.0
    %1364 = vmatpush2.xpose.msra.mxu0 0.0
    %1365 = vmatprep.subr.mxu0 0.0
    %1366 = vmatpush2.xpose.msra.mxu0 0.0
    %1367 = vmatprep.subr.mxu0 0.0
    %1368 = vmatpush2.xpose.msra.mxu0 0.0
    %1369 = vmatprep.subr.mxu0 0.0
    %1370 = vmatpush2.xpose.msra.mxu0 0.0
    %1371 = vmatprep.subr.mxu0 0.0
    %1372 = vmatpush2.xpose.msra.mxu0 0.0
    %1373 = vmatprep.mubr.f32.mxu0 %v1308
    %1374 = vmatmul.mubr.f32.gmra.mxu0 %v1306
    %v1375 = vpop.f32.mrf.mxu0
    %v1376 = vadd.f32 0.0, %v1375
    %v1377 = vpop.f32.mrf.mxu0
    %1378 = vdwg.mxu0
    %v1381 = vrot.slane %v1306, 1
    %v1382 = vrot.slane %v1308, 1
    %1385 = vmatprep.subr.mxu0 0.0
    %1386 = vmatpush1.xpose.msra.mxu0 0.0
    %1387 = vmatprep.subr.mxu0 0.0
    %1388 = vmatpush1.xpose.msra.mxu0 0.0
    %1389 = vmatprep.subr.mxu0 0.0
    %1390 = vmatpush1.xpose.msra.mxu0 0.0
    %1391 = vmatprep.subr.mxu0 0.0
    %1392 = vmatpush1.xpose.msra.mxu0 0.0
    %1393 = vmatprep.subr.mxu0 0.0
    %1394 = vmatpush1.xpose.msra.mxu0 0.0
    %1395 = vmatprep.subr.mxu0 0.0
    %1396 = vmatpush1.xpose.msra.mxu0 0.0
    %1397 = vmatprep.subr.mxu0 0.0
    %1398 = vmatpush1.xpose.msra.mxu0 0.0
    %1399 = vmatprep.subr.mxu0 0.0
    %1400 = vmatpush1.xpose.msra.mxu0 0.0
    %1401 = vmatprep.subr.mxu0 %v881
    %1402 = vmatpush1.xpose.msra.mxu0 %v880
    %1403 = vmatprep.subr.mxu0 %v879
    %1404 = vmatpush1.xpose.msra.mxu0 %v878
    %1405 = vmatprep.subr.mxu0 %v877
    %1406 = vmatpush1.xpose.msra.mxu0 %v876
    %1407 = vmatprep.subr.mxu0 %v875
    %1408 = vmatpush1.xpose.msra.mxu0 %v874
    %1409 = vmatprep.subr.mxu0 %v873
    %1410 = vmatpush1.xpose.msra.mxu0 %v872
    %1411 = vmatprep.subr.mxu0 %v871
    %1412 = vmatpush1.xpose.msra.mxu0 %v870
    %1413 = vmatprep.subr.mxu0 %v869
    %1414 = vmatpush1.xpose.msra.mxu0 %v868
    %1415 = vmatprep.subr.mxu0 %v867
    %1416 = vmatpush1.xpose.msra.mxu0 %v866
    %1417 = vmatprep.subr.mxu0 0.0
    %1418 = vmatpush2.xpose.msra.mxu0 0.0
    %1419 = vmatprep.subr.mxu0 0.0
    %1420 = vmatpush2.xpose.msra.mxu0 0.0
    %1421 = vmatprep.subr.mxu0 0.0
    %1422 = vmatpush2.xpose.msra.mxu0 0.0
    %1423 = vmatprep.subr.mxu0 0.0
    %1424 = vmatpush2.xpose.msra.mxu0 0.0
    %1425 = vmatprep.subr.mxu0 0.0
    %1426 = vmatpush2.xpose.msra.mxu0 0.0
    %1427 = vmatprep.subr.mxu0 0.0
    %1428 = vmatpush2.xpose.msra.mxu0 0.0
    %1429 = vmatprep.subr.mxu0 0.0
    %1430 = vmatpush2.xpose.msra.mxu0 0.0
    %1431 = vmatprep.subr.mxu0 0.0
    %1432 = vmatpush2.xpose.msra.mxu0 0.0
    %1433 = vmatprep.subr.mxu0 0.0
    %1434 = vmatpush2.xpose.msra.mxu0 0.0
    %1435 = vmatprep.subr.mxu0 0.0
    %1436 = vmatpush2.xpose.msra.mxu0 0.0
    %1437 = vmatprep.subr.mxu0 0.0
    %1438 = vmatpush2.xpose.msra.mxu0 0.0
    %1439 = vmatprep.subr.mxu0 0.0
    %1440 = vmatpush2.xpose.msra.mxu0 0.0
    %1441 = vmatprep.subr.mxu0 0.0
    %1442 = vmatpush2.xpose.msra.mxu0 0.0
    %1443 = vmatprep.subr.mxu0 0.0
    %1444 = vmatpush2.xpose.msra.mxu0 0.0
    %1445 = vmatprep.subr.mxu0 0.0
    %1446 = vmatpush2.xpose.msra.mxu0 0.0
    %1447 = vmatprep.subr.mxu0 0.0
    %1448 = vmatpush2.xpose.msra.mxu0 0.0
    %1449 = vmatprep.mubr.f32.mxu0 %v1382
    %1450 = vmatmul.mubr.f32.gmra.mxu0 %v1381
    %v1451 = vpop.f32.mrf.mxu0
    %v1452 = vadd.f32 0.0, %v1451
    %v1453 = vpop.f32.mrf.mxu0
    %1454 = vdwg.mxu0
    %v1456 = vrot.slane %v1452, 7
    %v1458 = vsel %vm1002, %v1376, %v1456
    %v1459 = vmul.f32 %v1458, 0.00390625
    %v1461 = vsel %vm481, %v1459, 0
    %1463 = vmatprep.subr.mxu0 0.0
    %1464 = vmatpush1.xpose.msra.mxu0 0.0
    %1465 = vmatprep.subr.mxu0 0.0
    %1466 = vmatpush1.xpose.msra.mxu0 0.0
    %1467 = vmatprep.subr.mxu0 0.0
    %1468 = vmatpush1.xpose.msra.mxu0 0.0
    %1469 = vmatprep.subr.mxu0 0.0
    %1470 = vmatpush1.xpose.msra.mxu0 0.0
    %1471 = vmatprep.subr.mxu0 0.0
    %1472 = vmatpush1.xpose.msra.mxu0 0.0
    %1473 = vmatprep.subr.mxu0 0.0
    %1474 = vmatpush1.xpose.msra.mxu0 0.0
    %1475 = vmatprep.subr.mxu0 0.0
    %1476 = vmatpush1.xpose.msra.mxu0 0.0
    %1477 = vmatprep.subr.mxu0 0.0
    %1478 = vmatpush1.xpose.msra.mxu0 0.0
    %1479 = vmatprep.subr.mxu0 0.0
    %1480 = vmatpush1.xpose.msra.mxu0 0.0
    %1481 = vmatprep.subr.mxu0 0.0
    %1482 = vmatpush1.xpose.msra.mxu0 0.0
    %1483 = vmatprep.subr.mxu0 0.0
    %1484 = vmatpush1.xpose.msra.mxu0 0.0
    %1485 = vmatprep.subr.mxu0 0.0
    %1486 = vmatpush1.xpose.msra.mxu0 0.0
    %1487 = vmatprep.subr.mxu0 0.0
    %1488 = vmatpush1.xpose.msra.mxu0 0.0
    %1489 = vmatprep.subr.mxu0 0.0
    %1490 = vmatpush1.xpose.msra.mxu0 0.0
    %1491 = vmatprep.subr.mxu0 0.0
    %1492 = vmatpush1.xpose.msra.mxu0 0.0
    %1493 = vmatprep.subr.mxu0 0.0
    %1494 = vmatpush1.xpose.msra.mxu0 %v1461
    %1495 = vmatprep.subr.mxu0 0.0
    %1496 = vmatpush2.xpose.msra.mxu0 0.0
    %1497 = vmatprep.subr.mxu0 0.0
    %1498 = vmatpush2.xpose.msra.mxu0 0.0
    %1499 = vmatprep.subr.mxu0 0.0
    %1500 = vmatpush2.xpose.msra.mxu0 0.0
    %1501 = vmatprep.subr.mxu0 0.0
    %1502 = vmatpush2.xpose.msra.mxu0 0.0
    %1503 = vmatprep.subr.mxu0 0.0
    %1504 = vmatpush2.xpose.msra.mxu0 0.0
    %1505 = vmatprep.subr.mxu0 0.0
    %1506 = vmatpush2.xpose.msra.mxu0 0.0
    %1507 = vmatprep.subr.mxu0 0.0
    %1508 = vmatpush2.xpose.msra.mxu0 0.0
    %1509 = vmatprep.subr.mxu0 0.0
    %1510 = vmatpush2.xpose.msra.mxu0 0.0
    %1511 = vmatprep.subr.mxu0 0.0
    %1512 = vmatpush2.xpose.msra.mxu0 0.0
    %1513 = vmatprep.subr.mxu0 0.0
    %1514 = vmatpush2.xpose.msra.mxu0 0.0
    %1515 = vmatprep.subr.mxu0 0.0
    %1516 = vmatpush2.xpose.msra.mxu0 0.0
    %1517 = vmatprep.subr.mxu0 0.0
    %1518 = vmatpush2.xpose.msra.mxu0 0.0
    %1519 = vmatprep.subr.mxu0 0.0
    %1520 = vmatpush2.xpose.msra.mxu0 0.0
    %1521 = vmatprep.subr.mxu0 0.0
    %1522 = vmatpush2.xpose.msra.mxu0 0.0
    %1523 = vmatprep.subr.mxu0 0.0
    %1524 = vmatpush2.xpose.msra.mxu0 0.0
    %1525 = vmatprep.subr.mxu0 0.0
    %1526 = vmatpush2.xpose.msra.mxu0 0.0
    %1527 = vmatprep.mubr.f32.mxu0 0.0
    %1528 = vmatmul.mubr.f32.gmra.mxu0 %v1461
    %v1529 = vpop.f32.mrf.mxu0
    %v1530 = vadd.f32 0.0, %v1529
    %v1531 = vpop.f32.mrf.mxu0
    %1532 = vdwg.mxu0
    %vm1533 = vcmask 9216
    %v1534 = vsel %vm1533, %v1530, -inf
    %1535 = vmax.xlane.f32.xlu0 %v1534
    %v1536 = vpop.xlane.xlu0 %1535
    %v1537 = vsub.f32 %v1530, %v1536
    %v1538 = vmul.f32 %v1537, 1.442695
    %v1539 = vpow.pop %v1538
    %v1540 = vsel %vm1533, %v1539, 0.0
    %1541 = vadd.xlane.f32.xlu0 %v1540
    %v1542 = vpop.xlane.xlu0 %1541
    %v1543 = vrcp.pop %v1542
    %v1544 = vmul.f32 %v1539, %v1543
    %v1546 = vsel %vm463, %v1544, 0
    %vm1548 = vcmask 1041408
    %v1549 = vsel %vm1548, %v1459, 0
    %1551 = vmatprep.subr.mxu0 0.0
    %1552 = vmatpush1.msra.mxu0 0.0
    %1553 = vmatprep.subr.mxu0 0.0
    %1554 = vmatpush1.msra.mxu0 0.0
    %1555 = vmatprep.subr.mxu0 0.0
    %1556 = vmatpush1.msra.mxu0 0.0
    %1557 = vmatprep.subr.mxu0 0.0
    %1558 = vmatpush1.msra.mxu0 0.0
    %1559 = vmatprep.subr.mxu0 0.0
    %1560 = vmatpush1.msra.mxu0 0.0
    %1561 = vmatprep.subr.mxu0 0.0
    %1562 = vmatpush1.msra.mxu0 0.0
    %1563 = vmatprep.subr.mxu0 0.0
    %1564 = vmatpush1.msra.mxu0 0.0
    %1565 = vmatprep.subr.mxu0 0.0
    %1566 = vmatpush1.msra.mxu0 0.0
    %1567 = vmatprep.subr.mxu0 0.0
    %1568 = vmatpush1.msra.mxu0 0.0
    %1569 = vmatprep.subr.mxu0 0.0
    %1570 = vmatpush1.msra.mxu0 0.0
    %1571 = vmatprep.subr.mxu0 0.0
    %1572 = vmatpush1.msra.mxu0 0.0
    %1573 = vmatprep.subr.mxu0 0.0
    %1574 = vmatpush1.msra.mxu0 0.0
    %1575 = vmatprep.subr.mxu0 0.0
    %1576 = vmatpush1.msra.mxu0 0.0
    %1577 = vmatprep.subr.mxu0 0.0
    %1578 = vmatpush1.msra.mxu0 0.0
    %1579 = vmatprep.subr.mxu0 0.0
    %1580 = vmatpush1.msra.mxu0 0.0
    %1581 = vmatprep.subr.mxu0 0.0
    %1582 = vmatpush1.msra.mxu0 %v1549
    %1583 = vmatprep.subr.mxu0 0.0
    %1584 = vmatpush2.msra.mxu0 0.0
    %1585 = vmatprep.subr.mxu0 0.0
    %1586 = vmatpush2.msra.mxu0 0.0
    %1587 = vmatprep.subr.mxu0 0.0
    %1588 = vmatpush2.msra.mxu0 0.0
    %1589 = vmatprep.subr.mxu0 0.0
    %1590 = vmatpush2.msra.mxu0 0.0
    %1591 = vmatprep.subr.mxu0 0.0
    %1592 = vmatpush2.msra.mxu0 0.0
    %1593 = vmatprep.subr.mxu0 0.0
    %1594 = vmatpush2.msra.mxu0 0.0
    %1595 = vmatprep.subr.mxu0 0.0
    %1596 = vmatpush2.msra.mxu0 0.0
    %1597 = vmatprep.subr.mxu0 0.0
    %1598 = vmatpush2.msra.mxu0 0.0
    %1599 = vmatprep.subr.mxu0 0.0
    %1600 = vmatpush2.msra.mxu0 0.0
    %1601 = vmatprep.subr.mxu0 0.0
    %1602 = vmatpush2.msra.mxu0 0.0
    %1603 = vmatprep.subr.mxu0 0.0
    %1604 = vmatpush2.msra.mxu0 0.0
    %1605 = vmatprep.subr.mxu0 0.0
    %1606 = vmatpush2.msra.mxu0 0.0
    %1607 = vmatprep.subr.mxu0 0.0
    %1608 = vmatpush2.msra.mxu0 0.0
    %1609 = vmatprep.subr.mxu0 0.0
    %1610 = vmatpush2.msra.mxu0 0.0
    %1611 = vmatprep.subr.mxu0 0.0
    %1612 = vmatpush2.msra.mxu0 0.0
    %1613 = vmatprep.subr.mxu0 0.0
    %1614 = vmatpush2.msra.mxu0 0.0
    %1615 = vmatprep.mubr.f32.mxu0 0.0
    %1616 = vmatmul.mubr.f32.gmra.mxu0 %v1546
    %v1617 = vpop.f32.mrf.mxu0
    %v1618 = vadd.f32 0.0, %v1617
    %v1619 = vpop.f32.mrf.mxu0
    %1620 = vdwg.mxu0
    %v1622 = vsel %vm481, %v1618, 0
    %1624 = vmatprep.subr.mxu0 0.0
    %1625 = vmatpush1.msra.mxu0 0.0
    %1626 = vmatprep.subr.mxu0 0.0
    %1627 = vmatpush1.msra.mxu0 0.0
    %1628 = vmatprep.subr.mxu0 0.0
    %1629 = vmatpush1.msra.mxu0 0.0
    %1630 = vmatprep.subr.mxu0 0.0
    %1631 = vmatpush1.msra.mxu0 0.0
    %1632 = vmatprep.subr.mxu0 0.0
    %1633 = vmatpush1.msra.mxu0 0.0
    %1634 = vmatprep.subr.mxu0 0.0
    %1635 = vmatpush1.msra.mxu0 0.0
    %1636 = vmatprep.subr.mxu0 0.0
    %1637 = vmatpush1.msra.mxu0 0.0
    %1638 = vmatprep.subr.mxu0 0.0
    %1639 = vmatpush1.msra.mxu0 0.0
    %1640 = vmatprep.subr.mxu0 0.0
    %1641 = vmatpush1.msra.mxu0 %v50
    %1642 = vmatprep.subr.mxu0 0.0
    %1643 = vmatpush1.msra.mxu0 %v49
    %1644 = vmatprep.subr.mxu0 0.0
    %1645 = vmatpush1.msra.mxu0 %v48
    %1646 = vmatprep.subr.mxu0 0.0
    %1647 = vmatpush1.msra.mxu0 %v47
    %1648 = vmatprep.subr.mxu0 0.0
    %1649 = vmatpush1.msra.mxu0 %v46
    %1650 = vmatprep.subr.mxu0 0.0
    %1651 = vmatpush1.msra.mxu0 %v45
    %1652 = vmatprep.subr.mxu0 0.0
    %1653 = vmatpush1.msra.mxu0 %v44
    %1654 = vmatprep.subr.mxu0 0.0
    %1655 = vmatpush1.msra.mxu0 %v43
    %1656 = vmatprep.subr.mxu0 0.0
    %1657 = vmatpush2.msra.mxu0 0.0
    %1658 = vmatprep.subr.mxu0 0.0
    %1659 = vmatpush2.msra.mxu0 0.0
    %1660 = vmatprep.subr.mxu0 0.0
    %1661 = vmatpush2.msra.mxu0 0.0
    %1662 = vmatprep.subr.mxu0 0.0
    %1663 = vmatpush2.msra.mxu0 0.0
    %1664 = vmatprep.subr.mxu0 0.0
    %1665 = vmatpush2.msra.mxu0 0.0
    %1666 = vmatprep.subr.mxu0 0.0
    %1667 = vmatpush2.msra.mxu0 0.0
    %1668 = vmatprep.subr.mxu0 0.0
    %1669 = vmatpush2.msra.mxu0 0.0
    %1670 = vmatprep.subr.mxu0 0.0
    %1671 = vmatpush2.msra.mxu0 0.0
    %1672 = vmatprep.subr.mxu0 0.0
    %1673 = vmatpush2.msra.mxu0 0.0
    %1674 = vmatprep.subr.mxu0 0.0
    %1675 = vmatpush2.msra.mxu0 0.0
    %1676 = vmatprep.subr.mxu0 0.0
    %1677 = vmatpush2.msra.mxu0 0.0
    %1678 = vmatprep.subr.mxu0 0.0
    %1679 = vmatpush2.msra.mxu0 0.0
    %1680 = vmatprep.subr.mxu0 0.0
    %1681 = vmatpush2.msra.mxu0 0.0
    %1682 = vmatprep.subr.mxu0 0.0
    %1683 = vmatpush2.msra.mxu0 0.0
    %1684 = vmatprep.subr.mxu0 0.0
    %1685 = vmatpush2.msra.mxu0 0.0
    %1686 = vmatprep.subr.mxu0 0.0
    %1687 = vmatpush2.msra.mxu0 0.0
    %1688 = vmatprep.mubr.f32.mxu0 0.0
    %1689 = vmatmul.mubr.f32.gmra.mxu0 %v1622
    %v1690 = vpop.f32.mrf.mxu0
    %v1691 = vadd.f32 0.0, %v1690
    %v1692 = vpop.f32.mrf.mxu0
    %1693 = vdwg.mxu0
    %vm1694 = vcmp.ge.f32.partialorder %v1691, 0.0
    %v1695 = vmul.f32 %v1691, 0.01
    %v1696 = vsel %vm1694, %v1691, %v1695
    %1697 = vmatprep.subr.mxu0 0.0
    %1698 = vmatpush1.msra.mxu0 0.0
    %1699 = vmatprep.subr.mxu0 0.0
    %1700 = vmatpush1.msra.mxu0 0.0
    %1701 = vmatprep.subr.mxu0 0.0
    %1702 = vmatpush1.msra.mxu0 0.0
    %1703 = vmatprep.subr.mxu0 0.0
    %1704 = vmatpush1.msra.mxu0 0.0
    %1705 = vmatprep.subr.mxu0 0.0
    %1706 = vmatpush1.msra.mxu0 0.0
    %1707 = vmatprep.subr.mxu0 0.0
    %1708 = vmatpush1.msra.mxu0 0.0
    %1709 = vmatprep.subr.mxu0 0.0
    %1710 = vmatpush1.msra.mxu0 0.0
    %1711 = vmatprep.subr.mxu0 0.0
    %1712 = vmatpush1.msra.mxu0 0.0
    %1713 = vmatprep.subr.mxu0 %v1154
    %1714 = vmatpush1.msra.mxu0 %v1153
    %1715 = vmatprep.subr.mxu0 %v1152
    %1716 = vmatpush1.msra.mxu0 %v1151
    %1717 = vmatprep.subr.mxu0 %v1150
    %1718 = vmatpush1.msra.mxu0 %v1149
    %1719 = vmatprep.subr.mxu0 %v1148
    %1720 = vmatpush1.msra.mxu0 %v1147
    %1721 = vmatprep.subr.mxu0 %v1146
    %1722 = vmatpush1.msra.mxu0 %v1145
    %1723 = vmatprep.subr.mxu0 %v1144
    %1724 = vmatpush1.msra.mxu0 %v1143
    %1725 = vmatprep.subr.mxu0 %v1142
    %1726 = vmatpush1.msra.mxu0 %v1141
    %1727 = vmatprep.subr.mxu0 %v1140
    %1728 = vmatpush1.msra.mxu0 %v1139
    %1729 = vmatprep.subr.mxu0 0.0
    %1730 = vmatpush2.msra.mxu0 0.0
    %1731 = vmatprep.subr.mxu0 0.0
    %1732 = vmatpush2.msra.mxu0 0.0
    %1733 = vmatprep.subr.mxu0 0.0
    %1734 = vmatpush2.msra.mxu0 0.0
    %1735 = vmatprep.subr.mxu0 0.0
    %1736 = vmatpush2.msra.mxu0 0.0
    %1737 = vmatprep.subr.mxu0 0.0
    %1738 = vmatpush2.msra.mxu0 0.0
    %1739 = vmatprep.subr.mxu0 0.0
    %1740 = vmatpush2.msra.mxu0 0.0
    %1741 = vmatprep.subr.mxu0 0.0
    %1742 = vmatpush2.msra.mxu0 0.0
    %1743 = vmatprep.subr.mxu0 0.0
    %1744 = vmatpush2.msra.mxu0 0.0
    %1745 = vmatprep.subr.mxu0 0.0
    %1746 = vmatpush2.msra.mxu0 0.0
    %1747 = vmatprep.subr.mxu0 0.0
    %1748 = vmatpush2.msra.mxu0 0.0
    %1749 = vmatprep.subr.mxu0 0.0
    %1750 = vmatpush2.msra.mxu0 0.0
    %1751 = vmatprep.subr.mxu0 0.0
    %1752 = vmatpush2.msra.mxu0 0.0
    %1753 = vmatprep.subr.mxu0 0.0
    %1754 = vmatpush2.msra.mxu0 0.0
    %1755 = vmatprep.subr.mxu0 0.0
    %1756 = vmatpush2.msra.mxu0 0.0
    %1757 = vmatprep.subr.mxu0 0.0
    %1758 = vmatpush2.msra.mxu0 0.0
    %1759 = vmatprep.subr.mxu0 0.0
    %1760 = vmatpush2.msra.mxu0 0.0
    %1761 = vmatprep.mubr.f32.mxu0 0.0
    %1762 = vmatmul.mubr.f32.gmra.mxu0 %v1461
    %v1763 = vpop.f32.mrf.mxu0
    %v1764 = vadd.f32 0.0, %v1763
    %v1765 = vpop.f32.mrf.mxu0
    %v1766 = vadd.f32 0.0, %v1765
    %1767 = vdwg.mxu0
    %vm1768 = vcmp.ge.f32.partialorder %v1764, 0.0
    %vm1769 = vcmp.ge.f32.partialorder %v1766, 0.0
    %v1770 = vmul.f32 %v1764, 0.01
    %v1771 = vmul.f32 %v1766, 0.01
    %v1772 = vsel %vm1768, %v1764, %v1770
    %v1773 = vsel %vm1769, %v1766, %v1771
    %vm1774 = vcmask 130048
    %v1776 = vsel %vm1774, %v1696, 0
    %1778 = vmatprep.subr.mxu0 0.0
    %1779 = vmatpush1.msra.mxu0 0.0
    %1780 = vmatprep.subr.mxu0 0.0
    %1781 = vmatpush1.msra.mxu0 0.0
    %1782 = vmatprep.subr.mxu0 0.0
    %1783 = vmatpush1.msra.mxu0 0.0
    %1784 = vmatprep.subr.mxu0 0.0
    %1785 = vmatpush1.msra.mxu0 0.0
    %1786 = vmatprep.subr.mxu0 0.0
    %1787 = vmatpush1.msra.mxu0 0.0
    %1788 = vmatprep.subr.mxu0 0.0
    %1789 = vmatpush1.msra.mxu0 0.0
    %1790 = vmatprep.subr.mxu0 0.0
    %1791 = vmatpush1.msra.mxu0 0.0
    %1792 = vmatprep.subr.mxu0 0.0
    %1793 = vmatpush1.msra.mxu0 0.0
    %1794 = vmatprep.subr.mxu0 0.0
    %1795 = vmatpush1.msra.mxu0 0.0
    %1796 = vmatprep.subr.mxu0 0.0
    %1797 = vmatpush1.msra.mxu0 0.0
    %1798 = vmatprep.subr.mxu0 0.0
    %1799 = vmatpush1.msra.mxu0 0.0
    %1800 = vmatprep.subr.mxu0 0.0
    %1801 = vmatpush1.msra.mxu0 0.0
    %1802 = vmatprep.subr.mxu0 0.0
    %1803 = vmatpush1.msra.mxu0 0.0
    %1804 = vmatprep.subr.mxu0 0.0
    %1805 = vmatpush1.msra.mxu0 0.0
    %1806 = vmatprep.subr.mxu0 0.0
    %1807 = vmatpush1.msra.mxu0 %v53
    %1808 = vmatprep.subr.mxu0 0.0
    %1809 = vmatpush1.msra.mxu0 %v52
    %1810 = vmatprep.subr.mxu0 0.0
    %1811 = vmatpush2.msra.mxu0 0.0
    %1812 = vmatprep.subr.mxu0 0.0
    %1813 = vmatpush2.msra.mxu0 0.0
    %1814 = vmatprep.subr.mxu0 0.0
    %1815 = vmatpush2.msra.mxu0 0.0
    %1816 = vmatprep.subr.mxu0 0.0
    %1817 = vmatpush2.msra.mxu0 0.0
    %1818 = vmatprep.subr.mxu0 0.0
    %1819 = vmatpush2.msra.mxu0 0.0
    %1820 = vmatprep.subr.mxu0 0.0
    %1821 = vmatpush2.msra.mxu0 0.0
    %1822 = vmatprep.subr.mxu0 0.0
    %1823 = vmatpush2.msra.mxu0 0.0
    %1824 = vmatprep.subr.mxu0 0.0
    %1825 = vmatpush2.msra.mxu0 0.0
    %1826 = vmatprep.subr.mxu0 0.0
    %1827 = vmatpush2.msra.mxu0 0.0
    %1828 = vmatprep.subr.mxu0 0.0
    %1829 = vmatpush2.msra.mxu0 0.0
    %1830 = vmatprep.subr.mxu0 0.0
    %1831 = vmatpush2.msra.mxu0 0.0
    %1832 = vmatprep.subr.mxu0 0.0
    %1833 = vmatpush2.msra.mxu0 0.0
    %1834 = vmatprep.subr.mxu0 0.0
    %1835 = vmatpush2.msra.mxu0 0.0
    %1836 = vmatprep.subr.mxu0 0.0
    %1837 = vmatpush2.msra.mxu0 0.0
    %1838 = vmatprep.subr.mxu0 0.0
    %1839 = vmatpush2.msra.mxu0 0.0
    %1840 = vmatprep.subr.mxu0 0.0
    %1841 = vmatpush2.msra.mxu0 0.0
    %1842 = vmatprep.mubr.f32.mxu0 0.0
    %1843 = vmatmul.mubr.f32.gmra.mxu0 %v1776
    %v1844 = vpop.f32.mrf.mxu0
    %v1845 = vadd.f32 0.0, %v1844
    %v1846 = vpop.f32.mrf.mxu0
    %1847 = vdwg.mxu0
    %1848 = vmatprep.subr.mxu0 0.0
    %1849 = vmatpush1.msra.mxu0 %v70
    %1850 = vmatprep.subr.mxu0 0.0
    %1851 = vmatpush1.msra.mxu0 %v69
    %1852 = vmatprep.subr.mxu0 0.0
    %1853 = vmatpush1.msra.mxu0 %v68
    %1854 = vmatprep.subr.mxu0 0.0
    %1855 = vmatpush1.msra.mxu0 %v67
    %1856 = vmatprep.subr.mxu0 0.0
    %1857 = vmatpush1.msra.mxu0 %v66
    %1858 = vmatprep.subr.mxu0 0.0
    %1859 = vmatpush1.msra.mxu0 %v65
    %1860 = vmatprep.subr.mxu0 0.0
    %1861 = vmatpush1.msra.mxu0 %v64
    %1862 = vmatprep.subr.mxu0 0.0
    %1863 = vmatpush1.msra.mxu0 %v63
    %1864 = vmatprep.subr.mxu0 0.0
    %1865 = vmatpush1.msra.mxu0 %v62
    %1866 = vmatprep.subr.mxu0 0.0
    %1867 = vmatpush1.msra.mxu0 %v61
    %1868 = vmatprep.subr.mxu0 0.0
    %1869 = vmatpush1.msra.mxu0 %v60
    %1870 = vmatprep.subr.mxu0 0.0
    %1871 = vmatpush1.msra.mxu0 %v59
    %1872 = vmatprep.subr.mxu0 0.0
    %1873 = vmatpush1.msra.mxu0 %v58
    %1874 = vmatprep.subr.mxu0 0.0
    %1875 = vmatpush1.msra.mxu0 %v57
    %1876 = vmatprep.subr.mxu0 0.0
    %1877 = vmatpush1.msra.mxu0 %v56
    %1878 = vmatprep.subr.mxu0 0.0
    %1879 = vmatpush1.msra.mxu0 %v55
    %1880 = vmatprep.subr.mxu0 0.0
    %1881 = vmatpush2.msra.mxu0 %v86
    %1882 = vmatprep.subr.mxu0 0.0
    %1883 = vmatpush2.msra.mxu0 %v85
    %1884 = vmatprep.subr.mxu0 0.0
    %1885 = vmatpush2.msra.mxu0 %v84
    %1886 = vmatprep.subr.mxu0 0.0
    %1887 = vmatpush2.msra.mxu0 %v83
    %1888 = vmatprep.subr.mxu0 0.0
    %1889 = vmatpush2.msra.mxu0 %v82
    %1890 = vmatprep.subr.mxu0 0.0
    %1891 = vmatpush2.msra.mxu0 %v81
    %1892 = vmatprep.subr.mxu0 0.0
    %1893 = vmatpush2.msra.mxu0 %v80
    %1894 = vmatprep.subr.mxu0 0.0
    %1895 = vmatpush2.msra.mxu0 %v79
    %1896 = vmatprep.subr.mxu0 0.0
    %1897 = vmatpush2.msra.mxu0 %v78
    %1898 = vmatprep.subr.mxu0 0.0
    %1899 = vmatpush2.msra.mxu0 %v77
    %1900 = vmatprep.subr.mxu0 0.0
    %1901 = vmatpush2.msra.mxu0 %v76
    %1902 = vmatprep.subr.mxu0 0.0
    %1903 = vmatpush2.msra.mxu0 %v75
    %1904 = vmatprep.subr.mxu0 0.0
    %1905 = vmatpush2.msra.mxu0 %v74
    %1906 = vmatprep.subr.mxu0 0.0
    %1907 = vmatpush2.msra.mxu0 %v73
    %1908 = vmatprep.subr.mxu0 0.0
    %1909 = vmatpush2.msra.mxu0 %v72
    %1910 = vmatprep.subr.mxu0 0.0
    %1911 = vmatpush2.msra.mxu0 %v71
    %1912 = vmatprep.mubr.f32.mxu0 %v1773
    %1913 = vmatmul.mubr.f32.gmra.mxu0 %v1772
    %v1914 = vpop.f32.mrf.mxu0
    %v1915 = vadd.f32 %v1845, %v1914
    %v1916 = vpop.f32.mrf.mxu0
    %1917 = vdwg.mxu0
    %v1918 = vlaneseq
    %v1919 = vshrl.u32 %v1918, 7
    %v1920 = vsub.s32 0, %v1919
    %v1921 = vrot.slane %v54, %v1920
    %v1922 = vadd.f32 %v1915, %v1921
    %1923 = vst [vmem:[#allocation4] sm:$0x3] %v1922
    // Predicated region
    $region18: #{amgcn_forward.1} parent=1 // pred_check
      _
    $region19: #{amgcn_forward.1} parent=1 // pred_check_branch
      %1925 = sbr.rel (0) target = $region21
    $region20: #{amgcn_forward.1} parent=1 // pred_region
      %s1927 = ssub.s32 32, 32
      %1928 = vsyncadd [#allocation5], %s1927
      %s1930 = sshll.u32 [#allocation4], 4
      %s1931 = int_to_ptr.vmem [resolvable:$true] %s1930
      %1933 = dma.vmem_to_hbm [thread:$0]  %s1931, 32, %s4, [#allocation5]
    $region21: #{amgcn_forward.1} parent=1 // pred_fallthru
      _
    // Predicated region
    $region22: #{amgcn_forward.1} parent=1 // pred_check
      _
    $region23: #{amgcn_forward.1} parent=1 // pred_check_branch
      %1935 = sbr.rel (0) target = $region25
    $region24: #{amgcn_forward.1} parent=1 // pred_region
      %1936 = dma.done [#allocation5], 32
    $region25: #{amgcn_forward.1} parent=1 // pred_fallthru
      _
    %1937 = vsyncpa [#allocation5], 1
  %1938 = vsyncmov [#allocation3]
  %s1939 = vpop.sfrf %1938
  %p1940 = scmp.eq.s32.totalorder %s1939, 0
  %p1941 = pneg %p1940
  %1943 = shalt.err (%p1941)

</llo_original>
